<compile_context>
chip_gen: v5e
topology: v5e:2x2
jax: 0.10.0
libtpu: 0.0.40
codegen_flags: <defaults>
</compile_context>

<pallas_src>
import functools
import math

import jax
import jax.numpy as jnp
from jax import lax
from jax.experimental import pallas as pl
from jax.experimental.pallas import tpu as pltpu

DIM = 384
PATCH_SIZE = 3
_VMEM_LIMIT = 48 * 1024 * 1024  # fits v7x's 64 MiB physical, generous on v5e/v6e


# ---------------------------------------------------------------------------
# Tile-size selection: prefer a divisor near the budget cap (no padding); fall
# back to padding up to a multiple of the cap when only tiny divisors exist.
# ---------------------------------------------------------------------------
def _largest_divisor_leq(n, cap):
    for d in range(min(n, cap), 0, -1):
        if n % d == 0:
            return d
    return 1


def _pick_tile(n, cap):
    cap = max(1, min(n, cap))
    d = _largest_divisor_leq(n, cap)
    if 4 * d >= cap:
        return d, n
    return cap, ((n + cap - 1) // cap) * cap


# ---------------------------------------------------------------------------
# Direct (im2col-free) convolution kernel.
#   Grid = (image, output-row band).  The phase-split padded image is a single
#   resident VMEM block; each band runs kh*kw accumulated MXU dots and a fused
#   epilogue (bias, optional scale, relu, residual add+relu) plus optional
#   per-band instance-norm sum/sumsq side outputs.
# ---------------------------------------------------------------------------
def _conv_kernel(*refs, kh, kw, stride, tho, Wo, Ho, act, scale,
                 with_res, with_stats):
    if with_res:
        x_ref, w_ref, b_ref, res_ref = refs[:4]
        refs = refs[4:]
    else:
        x_ref, w_ref, b_ref = refs[:3]
        res_ref = None
        refs = refs[3:]
    o_ref = refs[0]
    stats_ref = refs[1] if with_stats else None

    Cin = x_ref.shape[-1]
    Cout = o_ref.shape[-1]
    r = pl.program_id(1)

    acc = None
    for dy in range(kh):
        for dx in range(kw):
            ph = (dy % stride) * stride + (dx % stride)      # phase plane
            v = x_ref[0, ph,
                      pl.ds(r * tho + dy // stride, tho),
                      pl.ds(dx // stride, Wo), :]            # (tho, Wo, Cin)
            d = jnp.dot(v.reshape(tho * Wo, Cin), w_ref[dy * kw + dx],
                        preferred_element_type=jnp.float32)
            acc = d if acc is None else acc + d

    y = acc + b_ref[...]                                     # (tho*Wo, Cout)
    if scale != 1.0:
        y = y * scale

    if with_stats:
        # per-band, per-channel sum / sumsq of the (pre-activation) conv output
        # computed from the f32 accumulator, masked against padded output rows.
        # TODO(synk): a shifted/Welford accumulation would be more robust when
        #             |mean| >> std; f32 E[x^2]-E[x]^2 is kept for simplicity.
        y3 = y.reshape(tho, Wo, Cout)
        valid = (lax.broadcasted_iota(jnp.int32, (tho, 1, 1), 0) + r * tho) < Ho
        ym = y3 * valid.astype(jnp.float32)
        s = jnp.sum(ym, axis=(0, 1)).reshape(1, Cout)
        ss = jnp.sum(ym * ym, axis=(0, 1)).reshape(1, Cout)
        stats_ref[0, 0] = jnp.concatenate(
            [s, ss, jnp.zeros((6, Cout), jnp.float32)], axis=0)

    if act == "relu":
        y = jnp.maximum(y, 0.0)
    if with_res:
        res = res_ref[...].reshape(tho * Wo, Cout).astype(jnp.float32)
        y = jnp.maximum(y + res, 0.0)
    # TODO(synk): for Cout < 128 a lane-dense (rows*C/128, 128) store packing
    #             would remove masked vst; skipped to keep lowering simple.
    o_ref[...] = y.reshape(1, tho, Wo, Cout).astype(o_ref.dtype)


def conv2d(x, w, b, res=None, *, stride=1, padding=0, act="none", scale=1.0,
           want_stats=False, out_dtype=jnp.bfloat16):
    """Direct conv. x: (N,H,W,Cin) NHWC; w: torch layout (Cout,Cin,kh,kw)."""
    Cout, Cin, kh, kw = w.shape
    N, H, W, _ = x.shape
    S = stride
    # pad Cin up to a multiple of 8 (only the 3-channel stem) so MXU dots get a
    # friendly K without any im2col buffer.
    if Cin % 8:
        cpad = 8 - Cin % 8
        x = jnp.pad(x, ((0, 0), (0, 0), (0, 0), (0, cpad)))
        w = jnp.pad(w, ((0, 0), (0, cpad), (0, 0), (0, 0)))
        Cin += cpad

    Ho = (H + 2 * padding - kh) // S + 1
    Wo = (W + 2 * padding - kw) // S + 1
    tho, Hopad = _pick_tile(Ho, max(1, 8192 // max(Wo, 1)))  # ~8K px per band
    nbands = Hopad // tho
    Hneed = Hopad + (kh - 1) // S
    Wneed = Wo + (kw - 1) // S

    xp = jnp.pad(x.astype(jnp.bfloat16),
                 ((0, 0), (padding, S * Hneed - H - padding),
                  (padding, S * Wneed - W - padding), (0, 0)))
    if S == 1:
        xs = xp[:, None]                                     # (N,1,Hneed,Wneed,Cin)
    else:  # stride-phase split: avoids strided in-kernel loads, 1x-sized copy
        xs = jnp.stack([xp[:, py::S, px::S, :]
                        for py in range(S) for px in range(S)], axis=1)

    wt = jnp.transpose(w, (2, 3, 1, 0)).reshape(kh * kw, Cin, Cout)
    wt = wt.astype(jnp.bfloat16)
    bb = b.reshape(1, Cout).astype(jnp.float32)

    args = [xs, wt, bb]
    in_specs = [
        pl.BlockSpec((1, S * S, Hneed, Wneed, Cin), lambda i, r: (i, 0, 0, 0, 0)),
        pl.BlockSpec((kh * kw, Cin, Cout), lambda i, r: (0, 0, 0)),
        pl.BlockSpec((1, Cout), lambda i, r: (0, 0)),
    ]
    if res is not None:
        resb = res.astype(jnp.bfloat16)
        if Hopad != Ho:
            resb = jnp.pad(resb, ((0, 0), (0, Hopad - Ho), (0, 0), (0, 0)))
        args.append(resb)
        in_specs.append(pl.BlockSpec((1, tho, Wo, Cout), lambda i, r: (i, r, 0, 0)))

    out_shape = jax.ShapeDtypeStruct((N, Hopad, Wo, Cout), out_dtype)
    out_spec = pl.BlockSpec((1, tho, Wo, Cout), lambda i, r: (i, r, 0, 0))
    if want_stats:
        out_shape = (out_shape,
                     jax.ShapeDtypeStruct((N, nbands, 8, Cout), jnp.float32))
        out_spec = (out_spec,
                    pl.BlockSpec((1, 1, 8, Cout), lambda i, r: (i, r, 0, 0)))

    kern = functools.partial(_conv_kernel, kh=kh, kw=kw, stride=S, tho=tho,
                             Wo=Wo, Ho=Ho, act=act, scale=scale,
                             with_res=res is not None, with_stats=want_stats)
    outs = pl.pallas_call(
        kern,
        out_shape=out_shape,
        grid_spec=pltpu.PrefetchScalarGridSpec(
            num_scalar_prefetch=0,
            grid=(N, nbands),
            in_specs=in_specs,
            out_specs=out_spec),
        compiler_params=pltpu.CompilerParams(
            dimension_semantics=("parallel", "parallel"),
            vmem_limit_bytes=_VMEM_LIMIT),
    )(*args)

    if want_stats:
        out, stats = outs
    else:
        out, stats = outs, None
    if Hopad != Ho:
        out = out[:, :Ho]
    return (out, stats) if want_stats else out


# ---------------------------------------------------------------------------
# Instance norm (affine=False, eps=1e-5) from the conv-fused band statistics:
# only the normalize pass touches the feature map (relu / residual fused).
# ---------------------------------------------------------------------------
def _inorm_apply_kernel(x_ref, mean_ref, rstd_ref, o_ref, *, relu):
    y = (x_ref[...].astype(jnp.float32) - mean_ref[...]) * rstd_ref[...]
    if relu:
        y = jnp.maximum(y, 0.0)
    o_ref[...] = y.astype(o_ref.dtype)


def _inorm_apply_res_kernel(x_ref, mean_ref, rstd_ref, res_ref, o_ref):
    # relu(shortcut + relu(instance_norm(x)))  -- residual epilogue fused here.
    y = jnp.maximum(
        (x_ref[...].astype(jnp.float32) - mean_ref[...]) * rstd_ref[...], 0.0)
    y = jnp.maximum(y + res_ref[...].astype(jnp.float32), 0.0)
    o_ref[...] = y.astype(o_ref.dtype)


def instance_norm_from_stats(x, stats, count, *, relu=False, res=None):
    N, H, W, C = x.shape
    st = jnp.sum(stats, axis=1)                       # (N, 8, C), rows 0/1 used
    mean = st[:, 0:1, :] / count                      # (N, 1, C)
    var = jnp.maximum(st[:, 1:2, :] / count - mean * mean, 0.0)
    rstd = lax.rsqrt(var + 1e-5)

    R = H * W
    tr, Rpad = _pick_tile(R, 4096)
    xf = x.reshape(N, R, C)
    if Rpad != R:
        xf = jnp.pad(xf, ((0, 0), (0, Rpad - R), (0, 0)))
    args = [xf, mean, rstd]
    in_specs = [pl.BlockSpec((1, tr, C), lambda i, j: (i, j, 0)),
                pl.BlockSpec((1, 1, C), lambda i, j: (i, 0, 0)),
                pl.BlockSpec((1, 1, C), lambda i, j: (i, 0, 0))]
    if res is not None:
        rf = res.reshape(N, R, C)
        if Rpad != R:
            rf = jnp.pad(rf, ((0, 0), (0, Rpad - R), (0, 0)))
        args.append(rf)
        in_specs.append(pl.BlockSpec((1, tr, C), lambda i, j: (i, j, 0)))
        kern = _inorm_apply_res_kernel
    else:
        kern = functools.partial(_inorm_apply_kernel, relu=relu)

    out = pl.pallas_call(
        kern,
        out_shape=jax.ShapeDtypeStruct((N, Rpad, C), x.dtype),
        grid_spec=pltpu.PrefetchScalarGridSpec(
            num_scalar_prefetch=0,
            grid=(N, Rpad // tr),
            in_specs=in_specs,
            out_specs=pl.BlockSpec((1, tr, C), lambda i, j: (i, j, 0))),
        compiler_params=pltpu.CompilerParams(
            dimension_semantics=("parallel", "parallel"),
            vmem_limit_bytes=_VMEM_LIMIT),
    )(*args)
    if Rpad != R:
        out = out[:, :R]
    return out.reshape(N, H, W, C)


# ---------------------------------------------------------------------------
# Small matmul (+bias, *scale) used only for the gathered imap rows (64->384).
# ---------------------------------------------------------------------------
def _proj_kernel(x_ref, w_ref, b_ref, o_ref, *, scale):
    y = jnp.dot(x_ref[...], w_ref[...], preferred_element_type=jnp.float32)
    o_ref[...] = ((y + b_ref[...]) * scale).astype(o_ref.dtype)


def matmul_bias_scale(x, w, b, *, scale=1.0, out_dtype=jnp.float32):
    M, K = x.shape
    N = w.shape[1]
    Mp = ((M + 7) // 8) * 8
    tm = 256 if Mp >= 512 else Mp
    Mp = ((Mp + tm - 1) // tm) * tm
    xp = x.astype(jnp.bfloat16)
    if Mp != M:
        xp = jnp.pad(xp, ((0, Mp - M), (0, 0)))
    out = pl.pallas_call(
        functools.partial(_proj_kernel, scale=scale),
        out_shape=jax.ShapeDtypeStruct((Mp, N), out_dtype),
        grid_spec=pltpu.PrefetchScalarGridSpec(
            num_scalar_prefetch=0,
            grid=(Mp // tm,),
            in_specs=[pl.BlockSpec((tm, K), lambda i: (i, 0)),
                      pl.BlockSpec((K, N), lambda i: (0, 0)),
                      pl.BlockSpec((1, N), lambda i: (0, 0))],
            out_specs=pl.BlockSpec((tm, N), lambda i: (i, 0))),
        compiler_params=pltpu.CompilerParams(
            dimension_semantics=("parallel",),
            vmem_limit_bytes=_VMEM_LIMIT),
    )(xp, w.astype(jnp.bfloat16), b.reshape(1, N).astype(jnp.float32))
    return out[:M] if Mp != M else out


# ---------------------------------------------------------------------------
# Patchify: grid over (image, channel-chunk); loops the M patch coords (SMEM,
# scalar prefetch) inside the kernel and writes an (M, P, P, tc) block.
# ---------------------------------------------------------------------------
def _patchify_kernel(xs_ref, ys_ref, fmap_ref, out_ref, *, radius, P, M):
    i = pl.program_id(0)

    @pl.loop(0, M)
    def _(m):
        x = xs_ref[i, m]
        y = ys_ref[i, m]
        out_ref[0, m] = fmap_ref[0, pl.ds(y - radius, P), pl.ds(x - radius, P), :]


def patchify(fmaps, xs, ys, *, radius):
    """altcorr.patchify at integer coords: fmaps (n,H,W,C) -> (n,M,P,P,C)."""
    # TODO(synk): per-patch manual DMA (pl.ANY + make_async_copy) would avoid
    #             streaming the whole map per channel chunk; low priority here.
    n, H, W, C = fmaps.shape
    M = xs.shape[1]
    P = 2 * radius + 1
    tc = 128 if C % 128 == 0 else C
    return pl.pallas_call(
        functools.partial(_patchify_kernel, radius=radius, P=P, M=M),
        out_shape=jax.ShapeDtypeStruct((n, M, P, P, C), fmaps.dtype),
        grid_spec=pltpu.PrefetchScalarGridSpec(
            num_scalar_prefetch=2,
            grid=(n, C // tc),
            in_specs=[pl.BlockSpec((1, H, W, tc),
                                   lambda i, c, xs_r, ys_r: (i, 0, 0, c))],
            out_specs=pl.BlockSpec((1, M, P, P, tc),
                                   lambda i, c, xs_r, ys_r: (i, 0, 0, 0, c)),
        ),
        compiler_params=pltpu.CompilerParams(
            dimension_semantics=("parallel", "parallel"),
            vmem_limit_bytes=_VMEM_LIMIT),
    )(xs, ys, fmaps)


# ---------------------------------------------------------------------------
# BasicEncoder4 / ResidualBlock / Patchifier forward
# ---------------------------------------------------------------------------
def residual_block(x, p, norm_fn, *, stride):
    if norm_fn == "instance":
        y, st1 = conv2d(x, p["conv1_w"], p["conv1_b"], stride=stride, padding=1,
                        want_stats=True)
        cnt = y.shape[1] * y.shape[2]
        y = instance_norm_from_stats(y, st1, cnt, relu=True)
        y, st2 = conv2d(y, p["conv2_w"], p["conv2_b"], stride=1, padding=1,
                        want_stats=True)
        if stride != 1:
            s, st3 = conv2d(x, p["down_w"], p["down_b"], stride=stride,
                            padding=0, want_stats=True)
            s = instance_norm_from_stats(s, st3, cnt, relu=False)
        else:
            s = x
        # relu(shortcut + relu(norm2(conv2))) fused into the normalize pass
        return instance_norm_from_stats(y, st2, cnt, relu=True, res=s)
    else:  # norm_fn == 'none'
        y = conv2d(x, p["conv1_w"], p["conv1_b"], stride=stride, padding=1,
                   act="relu")
        if stride != 1:
            s = conv2d(x, p["down_w"], p["down_b"], stride=stride, padding=0)
        else:
            s = x
        # relu(shortcut + relu(conv2 + b)) fused into the conv epilogue
        return conv2d(y, p["conv2_w"], p["conv2_b"], stride=1, padding=1,
                      act="relu", res=s)


def basic_encoder4(x, p, norm_fn, *, out_scale=1.0, final_conv=True):
    """x: (N,H,W,3) -> (N,H/4,W/4,output_dim) bf16 (or the 64-ch pre-final map
    when final_conv=False); out_scale (the /4) fused into the last conv."""
    if norm_fn == "instance":
        y, st = conv2d(x, p["conv1_w"], p["conv1_b"], stride=2, padding=3,
                       want_stats=True)
        y = instance_norm_from_stats(y, st, y.shape[1] * y.shape[2], relu=True)
    else:
        y = conv2d(x, p["conv1_w"], p["conv1_b"], stride=2, padding=3, act="relu")
    y = residual_block(y, p["l1b1"], norm_fn, stride=1)
    y = residual_block(y, p["l1b2"], norm_fn, stride=1)
    y = residual_block(y, p["l2b1"], norm_fn, stride=2)
    y = residual_block(y, p["l2b2"], norm_fn, stride=1)
    if final_conv:
        y = conv2d(y, p["conv2_w"], p["conv2_b"], stride=1, padding=0,
                   act="none", scale=out_scale)
    return y


def patchifier_forward(images, params, xs, ys):
    """images: (b,n,3,H,W) NCHW (b == 1 as in DPVO); xs/ys: (n,M) int32 patch
    centers at the /4 feature resolution (stands in for torch.randint)."""
    # TODO(synk): gradient_bias branch (image-gradient-biased sampling/argsort),
    #             return_color path and b > 1 batching are not implemented.
    b, n, c, H, W = images.shape
    M = xs.shape[1]
    P = PATCH_SIZE
    r = P // 2
    x = images.reshape(b * n, c, H, W).transpose(0, 2, 3, 1)              # NHWC
    fmap = basic_encoder4(x, params["fnet"], "instance", out_scale=0.25)  # (n,H/4,W/4,128)
    # inet: keep only the 64-ch pre-final map; the 64->384 conv runs on the
    # gathered patch centers only (the full imap is never built).
    ibase = basic_encoder4(x, params["inet"], "none", final_conv=False)   # (n,H/4,W/4,64)
    h4, w4 = fmap.shape[1], fmap.shape[2]

    # clamp coords so the PxP window never reads out of bounds
    xs_c = jnp.clip(xs, r, w4 - 1 - r).astype(jnp.int32)
    ys_c = jnp.clip(ys, r, h4 - 1 - r).astype(jnp.int32)

    gmap_p = patchify(fmap, xs_c, ys_c, radius=r)          # (n, M, P, P, 128)
    ibase_p = patchify(ibase, xs_c, ys_c, radius=0)        # (n, M, 1, 1, 64)

    w2, b2 = params["inet"]["conv2_w"], params["inet"]["conv2_b"]
    wmat = jnp.transpose(w2, (2, 3, 1, 0)).reshape(w2.shape[1], DIM)
    imap_rows = matmul_bias_scale(ibase_p.reshape(n * M, -1), wmat, b2,
                                  scale=0.25)              # (n*M, DIM) f32

    # coords_grid_with_index(disps=ones) patches: pure index arithmetic
    offs = jnp.arange(-r, r + 1, dtype=jnp.float32)
    cx = xs_c.astype(jnp.float32)[:, :, None, None] + offs[None, None, None, :]
    cy = ys_c.astype(jnp.float32)[:, :, None, None] + offs[None, None, :, None]
    cx = jnp.broadcast_to(cx, (n, M, P, P))
    cy = jnp.broadcast_to(cy, (n, M, P, P))
    patches_p = jnp.stack([cx, cy, jnp.ones_like(cx)], axis=-1)   # (n,M,P,P,3)

    # back to PyTorch layouts (f32 like the torch module)
    fmap_out = fmap.astype(jnp.float32).transpose(0, 3, 1, 2).reshape(b, n, 128, h4, w4)
    gmap_out = gmap_p.astype(jnp.float32).reshape(b, n * M, P, P, 128).transpose(0, 1, 4, 2, 3)
    imap_out = imap_rows.astype(jnp.float32).reshape(b, n * M, DIM, 1, 1)
    patches_out = patches_p.reshape(b, n * M, P, P, 3).transpose(0, 1, 4, 2, 3)
    index = jnp.repeat(jnp.arange(n, dtype=jnp.int32), M)
    return fmap_out, gmap_out, imap_out, patches_out, index


# ---------------------------------------------------------------------------
# Deterministic parameter init (shapes from BasicEncoder4.__init__)
# ---------------------------------------------------------------------------
def _conv_init(key, cout, cin, k):
    kw, kb = jax.random.split(key)
    w = jax.random.normal(kw, (cout, cin, k, k), jnp.float32) / math.sqrt(cin * k * k)
    b = 0.01 * jax.random.normal(kb, (cout,), jnp.float32)
    return w, b


def _block_params(key, cin, cout, stride):
    ks = jax.random.split(key, 3)
    p = {}
    p["conv1_w"], p["conv1_b"] = _conv_init(ks[0], cout, cin, 3)
    p["conv2_w"], p["conv2_b"] = _conv_init(ks[1], cout, cout, 3)
    if stride != 1:
        p["down_w"], p["down_b"] = _conv_init(ks[2], cout, cin, 1)
    return p


def make_encoder_params(key, output_dim):
    ks = jax.random.split(key, 6)
    p = {}
    p["conv1_w"], p["conv1_b"] = _conv_init(ks[0], 32, 3, 7)
    p["l1b1"] = _block_params(ks[1], 32, 32, 1)
    p["l1b2"] = _block_params(ks[2], 32, 32, 1)
    p["l2b1"] = _block_params(ks[3], 32, 64, 2)
    p["l2b2"] = _block_params(ks[4], 64, 64, 1)
    p["conv2_w"], p["conv2_b"] = _conv_init(ks[5], output_dim, 64, 1)
    return p


# ---------------------------------------------------------------------------
if __name__ == "__main__":
    key = jax.random.PRNGKey(0)
    (k_img, k_fnet, k_inet, kx, ky,
     k_c1, k_c2, k_n1, k_n2) = jax.random.split(key, 9)

    b, n, H, W = 1, 2, 32, 32
    patches_per_image = 8
    images = jax.random.uniform(k_img, (b, n, 3, H, W), jnp.float32) - 0.5

    params = {"fnet": make_encoder_params(k_fnet, 128),
              "inet": make_encoder_params(k_inet, DIM)}

    h4, w4 = H // 4, W // 4
    xs = jax.random.randint(kx, (n, patches_per_image), 1, w4 - 1, dtype=jnp.int32)
    ys = jax.random.randint(ky, (n, patches_per_image), 1, h4 - 1, dtype=jnp.int32)

    # sanity 1: direct Pallas conv (bf16 MXU, f32 acc) matches lax.conv in bf16
    xt = jax.random.normal(k_c1, (2, 9, 9, 5), jnp.float32)
    wt = jax.random.normal(k_c2, (7, 5, 3, 3), jnp.float32)
    y_pl = conv2d(xt, wt, jnp.zeros((7,), jnp.float32), stride=2, padding=1)
    y_ref = lax.conv_general_dilated(
        xt.astype(jnp.bfloat16),
        jnp.transpose(wt, (2, 3, 1, 0)).astype(jnp.bfloat16),
        (2, 2), [(1, 1), (1, 1)],
        dimension_numbers=("NHWC", "HWIO", "NHWC"),
        preferred_element_type=jnp.float32)
    assert jnp.allclose(y_pl.astype(jnp.float32), y_ref, atol=1e-1, rtol=5e-2), \
        "conv mismatch"

    # sanity 2: fused conv-stats + instance-norm apply matches a jnp reference
    xn = jax.random.normal(k_n1, (2, 8, 8, 16), jnp.float32)
    wn = 0.1 * jax.random.normal(k_n2, (16, 16, 3, 3), jnp.float32)
    yb, stb = conv2d(xn, wn, jnp.zeros((16,), jnp.float32), stride=1, padding=1,
                     want_stats=True)
    y_in = instance_norm_from_stats(yb, stb, yb.shape[1] * yb.shape[2], relu=True)
    yf = yb.astype(jnp.float32)
    mu = yf.mean(axis=(1, 2), keepdims=True)
    var = yf.var(axis=(1, 2), keepdims=True)
    ref_in = jnp.maximum((yf - mu) * lax.rsqrt(var + 1e-5), 0.0)
    assert jnp.allclose(y_in.astype(jnp.float32), ref_in, atol=1e-1, rtol=5e-2), \
        "instance norm mismatch"

    fwd = jax.jit(patchifier_forward)
    fmap, gmap, imap, patches, index = jax.block_until_ready(
        fwd(images, params, xs, ys))

    M = patches_per_image
    assert fmap.shape == (b, n, 128, h4, w4)
    assert gmap.shape == (b, n * M, 128, 3, 3)
    assert imap.shape == (b, n * M, DIM, 1, 1)
    assert patches.shape == (b, n * M, 3, 3, 3)
    assert index.shape == (n * M,)

    # sanity 3: gmap patch equals a direct slice of fmap around (x, y)
    i, m = 1, 3
    xi, yi = int(xs[i, m]), int(ys[i, m])
    ref_patch = fmap[0, i, :, yi - 1:yi + 2, xi - 1:xi + 2]
    assert jnp.allclose(gmap[0, i * M + m], ref_patch, atol=1e-5), "patchify mismatch"

    # sanity 4: patch grid carries (x, y, disp=1) channels
    assert jnp.allclose(patches[0, i * M + m, 0, 1, 1], float(xi))
    assert jnp.allclose(patches[0, i * M + m, 1, 1, 1], float(yi))
    assert jnp.allclose(patches[0, i * M + m, 2], 1.0)

    print("KERNEL_OK")
</pallas_src>

<mosaic_0001>
module attributes {stable_mosaic.version = 11 : i64} {
  func.func @_conv_kernel(%arg0: i32, %arg1: i32, %arg2: memref<1x4x6x6x8xbf16, #tpu.memory_space<vmem>>, %arg3: memref<9x8x7xbf16, #tpu.memory_space<vmem>>, %arg4: memref<1x7xf32, #tpu.memory_space<vmem>>, %arg5: memref<1x5x5x7xbf16, #tpu.memory_space<vmem>>) attributes {dimension_semantics = [#tpu.dimension_semantics<parallel>, #tpu.dimension_semantics<parallel>], iteration_bounds = array<i64: 2, 1>, scalar_prefetch = 0 : i64, scratch_operands = 0 : i64, tpu.core_type = #tpu.core_type<tc>, window_params = [{transform_indices = @transform_0, window_bounds = array<i64: 1, 4, 6, 6, 8>}, {pipeline_mode = #tpu.pipeline_mode<synchronous>, transform_indices = @transform_1, window_bounds = array<i64: 9, 8, 7>}, {pipeline_mode = #tpu.pipeline_mode<synchronous>, transform_indices = @transform_2, window_bounds = array<i64: 1, 7>}, {transform_indices = @transform_3, window_bounds = array<i64: 1, 5, 5, 7>}]} {
    %c5_i32 = arith.constant 5 : i32
    %0 = arith.muli %arg1, %c5_i32 : i32
    %c0_i32 = arith.constant 0 : i32
    %1 = arith.addi %0, %c0_i32 : i32
    %c0 = arith.constant 0 : index
    %c0_0 = arith.constant 0 : index
    %2 = arith.index_cast %1 : i32 to index
    %c0_1 = arith.constant 0 : index
    %c0_2 = arith.constant 0 : index
    %3 = vector.load %arg2[%c0, %c0_0, %2, %c0_1, %c0_2] : memref<1x4x6x6x8xbf16, #tpu.memory_space<vmem>>, vector<1x1x5x5x8xbf16>
    %4 = vector.shape_cast %3 : vector<1x1x5x5x8xbf16> to vector<5x5x8xbf16>
    %5 = vector.shape_cast %4 : vector<5x5x8xbf16> to vector<25x8xbf16>
    %c0_3 = arith.constant 0 : index
    %c0_4 = arith.constant 0 : index
    %c0_5 = arith.constant 0 : index
    %6 = vector.load %arg3[%c0_3, %c0_4, %c0_5] : memref<9x8x7xbf16, #tpu.memory_space<vmem>>, vector<1x8x7xbf16>
    %7 = vector.shape_cast %6 : vector<1x8x7xbf16> to vector<8x7xbf16>
    %cst = arith.constant dense<0.000000e+00> : vector<25x7xf32>
    %8 = tpu.matmul %5, %7, %cst {dimension_numbers = #tpu.dot_dimension_numbers<[1], [0], [0], [1], [0, 0, 1, 1], [], []>} : vector<25x8xbf16>, vector<8x7xbf16>, vector<25x7xf32> -> vector<25x7xf32>
    %c5_i32_6 = arith.constant 5 : i32
    %9 = arith.muli %arg1, %c5_i32_6 : i32
    %c0_i32_7 = arith.constant 0 : i32
    %10 = arith.addi %9, %c0_i32_7 : i32
    %c0_8 = arith.constant 0 : index
    %c1 = arith.constant 1 : index
    %11 = arith.index_cast %10 : i32 to index
    %c0_9 = arith.constant 0 : index
    %c0_10 = arith.constant 0 : index
    %12 = vector.load %arg2[%c0_8, %c1, %11, %c0_9, %c0_10] : memref<1x4x6x6x8xbf16, #tpu.memory_space<vmem>>, vector<1x1x5x5x8xbf16>
    %13 = vector.shape_cast %12 : vector<1x1x5x5x8xbf16> to vector<5x5x8xbf16>
    %14 = vector.shape_cast %13 : vector<5x5x8xbf16> to vector<25x8xbf16>
    %c1_11 = arith.constant 1 : index
    %c0_12 = arith.constant 0 : index
    %c0_13 = arith.constant 0 : index
    %15 = vector.load %arg3[%c1_11, %c0_12, %c0_13] : memref<9x8x7xbf16, #tpu.memory_space<vmem>>, vector<1x8x7xbf16>
    %16 = vector.shape_cast %15 : vector<1x8x7xbf16> to vector<8x7xbf16>
    %cst_14 = arith.constant dense<0.000000e+00> : vector<25x7xf32>
    %17 = tpu.matmul %14, %16, %cst_14 {dimension_numbers = #tpu.dot_dimension_numbers<[1], [0], [0], [1], [0, 0, 1, 1], [], []>} : vector<25x8xbf16>, vector<8x7xbf16>, vector<25x7xf32> -> vector<25x7xf32>
    %18 = arith.addf %8, %17 : vector<25x7xf32>
    %c5_i32_15 = arith.constant 5 : i32
    %19 = arith.muli %arg1, %c5_i32_15 : i32
    %c0_i32_16 = arith.constant 0 : i32
    %20 = arith.addi %19, %c0_i32_16 : i32
    %c0_17 = arith.constant 0 : index
    %c0_18 = arith.constant 0 : index
    %21 = arith.index_cast %20 : i32 to index
    %c1_19 = arith.constant 1 : index
    %c0_20 = arith.constant 0 : index
    %22 = vector.load %arg2[%c0_17, %c0_18, %21, %c1_19, %c0_20] : memref<1x4x6x6x8xbf16, #tpu.memory_space<vmem>>, vector<1x1x5x5x8xbf16>
    %23 = vector.shape_cast %22 : vector<1x1x5x5x8xbf16> to vector<5x5x8xbf16>
    %24 = vector.shape_cast %23 : vector<5x5x8xbf16> to vector<25x8xbf16>
    %c2 = arith.constant 2 : index
    %c0_21 = arith.constant 0 : index
    %c0_22 = arith.constant 0 : index
    %25 = vector.load %arg3[%c2, %c0_21, %c0_22] : memref<9x8x7xbf16, #tpu.memory_space<vmem>>, vector<1x8x7xbf16>
    %26 = vector.shape_cast %25 : vector<1x8x7xbf16> to vector<8x7xbf16>
    %cst_23 = arith.constant dense<0.000000e+00> : vector<25x7xf32>
    %27 = tpu.matmul %24, %26, %cst_23 {dimension_numbers = #tpu.dot_dimension_numbers<[1], [0], [0], [1], [0, 0, 1, 1], [], []>} : vector<25x8xbf16>, vector<8x7xbf16>, vector<25x7xf32> -> vector<25x7xf32>
    %28 = arith.addf %18, %27 : vector<25x7xf32>
    %c5_i32_24 = arith.constant 5 : i32
    %29 = arith.muli %arg1, %c5_i32_24 : i32
    %c0_i32_25 = arith.constant 0 : i32
    %30 = arith.addi %29, %c0_i32_25 : i32
    %c0_26 = arith.constant 0 : index
    %c2_27 = arith.constant 2 : index
    %31 = arith.index_cast %30 : i32 to index
    %c0_28 = arith.constant 0 : index
    %c0_29 = arith.constant 0 : index
    %32 = vector.load %arg2[%c0_26, %c2_27, %31, %c0_28, %c0_29] : memref<1x4x6x6x8xbf16, #tpu.memory_space<vmem>>, vector<1x1x5x5x8xbf16>
    %33 = vector.shape_cast %32 : vector<1x1x5x5x8xbf16> to vector<5x5x8xbf16>
    %34 = vector.shape_cast %33 : vector<5x5x8xbf16> to vector<25x8xbf16>
    %c3 = arith.constant 3 : index
    %c0_30 = arith.constant 0 : index
    %c0_31 = arith.constant 0 : index
    %35 = vector.load %arg3[%c3, %c0_30, %c0_31] : memref<9x8x7xbf16, #tpu.memory_space<vmem>>, vector<1x8x7xbf16>
    %36 = vector.shape_cast %35 : vector<1x8x7xbf16> to vector<8x7xbf16>
    %cst_32 = arith.constant dense<0.000000e+00> : vector<25x7xf32>
    %37 = tpu.matmul %34, %36, %cst_32 {dimension_numbers = #tpu.dot_dimension_numbers<[1], [0], [0], [1], [0, 0, 1, 1], [], []>} : vector<25x8xbf16>, vector<8x7xbf16>, vector<25x7xf32> -> vector<25x7xf32>
    %38 = arith.addf %28, %37 : vector<25x7xf32>
    %c5_i32_33 = arith.constant 5 : i32
    %39 = arith.muli %arg1, %c5_i32_33 : i32
    %c0_i32_34 = arith.constant 0 : i32
    %40 = arith.addi %39, %c0_i32_34 : i32
    %c0_35 = arith.constant 0 : index
    %c3_36 = arith.constant 3 : index
    %41 = arith.index_cast %40 : i32 to index
    %c0_37 = arith.constant 0 : index
    %c0_38 = arith.constant 0 : index
    %42 = vector.load %arg2[%c0_35, %c3_36, %41, %c0_37, %c0_38] : memref<1x4x6x6x8xbf16, #tpu.memory_space<vmem>>, vector<1x1x5x5x8xbf16>
    %43 = vector.shape_cast %42 : vector<1x1x5x5x8xbf16> to vector<5x5x8xbf16>
    %44 = vector.shape_cast %43 : vector<5x5x8xbf16> to vector<25x8xbf16>
    %c4 = arith.constant 4 : index
    %c0_39 = arith.constant 0 : index
    %c0_40 = arith.constant 0 : index
    %45 = vector.load %arg3[%c4, %c0_39, %c0_40] : memref<9x8x7xbf16, #tpu.memory_space<vmem>>, vector<1x8x7xbf16>
    %46 = vector.shape_cast %45 : vector<1x8x7xbf16> to vector<8x7xbf16>
    %cst_41 = arith.constant dense<0.000000e+00> : vector<25x7xf32>
    %47 = tpu.matmul %44, %46, %cst_41 {dimension_numbers = #tpu.dot_dimension_numbers<[1], [0], [0], [1], [0, 0, 1, 1], [], []>} : vector<25x8xbf16>, vector<8x7xbf16>, vector<25x7xf32> -> vector<25x7xf32>
    %48 = arith.addf %38, %47 : vector<25x7xf32>
    %c5_i32_42 = arith.constant 5 : i32
    %49 = arith.muli %arg1, %c5_i32_42 : i32
    %c0_i32_43 = arith.constant 0 : i32
    %50 = arith.addi %49, %c0_i32_43 : i32
    %c0_44 = arith.constant 0 : index
    %c2_45 = arith.constant 2 : index
    %51 = arith.index_cast %50 : i32 to index
    %c1_46 = arith.constant 1 : index
    %c0_47 = arith.constant 0 : index
    %52 = vector.load %arg2[%c0_44, %c2_45, %51, %c1_46, %c0_47] : memref<1x4x6x6x8xbf16, #tpu.memory_space<vmem>>, vector<1x1x5x5x8xbf16>
    %53 = vector.shape_cast %52 : vector<1x1x5x5x8xbf16> to vector<5x5x8xbf16>
    %54 = vector.shape_cast %53 : vector<5x5x8xbf16> to vector<25x8xbf16>
    %c5 = arith.constant 5 : index
    %c0_48 = arith.constant 0 : index
    %c0_49 = arith.constant 0 : index
    %55 = vector.load %arg3[%c5, %c0_48, %c0_49] : memref<9x8x7xbf16, #tpu.memory_space<vmem>>, vector<1x8x7xbf16>
    %56 = vector.shape_cast %55 : vector<1x8x7xbf16> to vector<8x7xbf16>
    %cst_50 = arith.constant dense<0.000000e+00> : vector<25x7xf32>
    %57 = tpu.matmul %54, %56, %cst_50 {dimension_numbers = #tpu.dot_dimension_numbers<[1], [0], [0], [1], [0, 0, 1, 1], [], []>} : vector<25x8xbf16>, vector<8x7xbf16>, vector<25x7xf32> -> vector<25x7xf32>
    %58 = arith.addf %48, %57 : vector<25x7xf32>
    %c5_i32_51 = arith.constant 5 : i32
    %59 = arith.muli %arg1, %c5_i32_51 : i32
    %c1_i32 = arith.constant 1 : i32
    %60 = arith.addi %59, %c1_i32 : i32
    %c0_52 = arith.constant 0 : index
    %c0_53 = arith.constant 0 : index
    %61 = arith.index_cast %60 : i32 to index
    %c0_54 = arith.constant 0 : index
    %c0_55 = arith.constant 0 : index
    %62 = vector.load %arg2[%c0_52, %c0_53, %61, %c0_54, %c0_55] : memref<1x4x6x6x8xbf16, #tpu.memory_space<vmem>>, vector<1x1x5x5x8xbf16>
    %63 = vector.shape_cast %62 : vector<1x1x5x5x8xbf16> to vector<5x5x8xbf16>
    %64 = vector.shape_cast %63 : vector<5x5x8xbf16> to vector<25x8xbf16>
    %c6 = arith.constant 6 : index
    %c0_56 = arith.constant 0 : index
    %c0_57 = arith.constant 0 : index
    %65 = vector.load %arg3[%c6, %c0_56, %c0_57] : memref<9x8x7xbf16, #tpu.memory_space<vmem>>, vector<1x8x7xbf16>
    %66 = vector.shape_cast %65 : vector<1x8x7xbf16> to vector<8x7xbf16>
    %cst_58 = arith.constant dense<0.000000e+00> : vector<25x7xf32>
    %67 = tpu.matmul %64, %66, %cst_58 {dimension_numbers = #tpu.dot_dimension_numbers<[1], [0], [0], [1], [0, 0, 1, 1], [], []>} : vector<25x8xbf16>, vector<8x7xbf16>, vector<25x7xf32> -> vector<25x7xf32>
    %68 = arith.addf %58, %67 : vector<25x7xf32>
    %c5_i32_59 = arith.constant 5 : i32
    %69 = arith.muli %arg1, %c5_i32_59 : i32
    %c1_i32_60 = arith.constant 1 : i32
    %70 = arith.addi %69, %c1_i32_60 : i32
    %c0_61 = arith.constant 0 : index
    %c1_62 = arith.constant 1 : index
    %71 = arith.index_cast %70 : i32 to index
    %c0_63 = arith.constant 0 : index
    %c0_64 = arith.constant 0 : index
    %72 = vector.load %arg2[%c0_61, %c1_62, %71, %c0_63, %c0_64] : memref<1x4x6x6x8xbf16, #tpu.memory_space<vmem>>, vector<1x1x5x5x8xbf16>
    %73 = vector.shape_cast %72 : vector<1x1x5x5x8xbf16> to vector<5x5x8xbf16>
    %74 = vector.shape_cast %73 : vector<5x5x8xbf16> to vector<25x8xbf16>
    %c7 = arith.constant 7 : index
    %c0_65 = arith.constant 0 : index
    %c0_66 = arith.constant 0 : index
    %75 = vector.load %arg3[%c7, %c0_65, %c0_66] : memref<9x8x7xbf16, #tpu.memory_space<vmem>>, vector<1x8x7xbf16>
    %76 = vector.shape_cast %75 : vector<1x8x7xbf16> to vector<8x7xbf16>
    %cst_67 = arith.constant dense<0.000000e+00> : vector<25x7xf32>
    %77 = tpu.matmul %74, %76, %cst_67 {dimension_numbers = #tpu.dot_dimension_numbers<[1], [0], [0], [1], [0, 0, 1, 1], [], []>} : vector<25x8xbf16>, vector<8x7xbf16>, vector<25x7xf32> -> vector<25x7xf32>
    %78 = arith.addf %68, %77 : vector<25x7xf32>
    %c5_i32_68 = arith.constant 5 : i32
    %79 = arith.muli %arg1, %c5_i32_68 : i32
    %c1_i32_69 = arith.constant 1 : i32
    %80 = arith.addi %79, %c1_i32_69 : i32
    %c0_70 = arith.constant 0 : index
    %c0_71 = arith.constant 0 : index
    %81 = arith.index_cast %80 : i32 to index
    %c1_72 = arith.constant 1 : index
    %c0_73 = arith.constant 0 : index
    %82 = vector.load %arg2[%c0_70, %c0_71, %81, %c1_72, %c0_73] : memref<1x4x6x6x8xbf16, #tpu.memory_space<vmem>>, vector<1x1x5x5x8xbf16>
    %83 = vector.shape_cast %82 : vector<1x1x5x5x8xbf16> to vector<5x5x8xbf16>
    %84 = vector.shape_cast %83 : vector<5x5x8xbf16> to vector<25x8xbf16>
    %c8 = arith.constant 8 : index
    %c0_74 = arith.constant 0 : index
    %c0_75 = arith.constant 0 : index
    %85 = vector.load %arg3[%c8, %c0_74, %c0_75] : memref<9x8x7xbf16, #tpu.memory_space<vmem>>, vector<1x8x7xbf16>
    %86 = vector.shape_cast %85 : vector<1x8x7xbf16> to vector<8x7xbf16>
    %cst_76 = arith.constant dense<0.000000e+00> : vector<25x7xf32>
    %87 = tpu.matmul %84, %86, %cst_76 {dimension_numbers = #tpu.dot_dimension_numbers<[1], [0], [0], [1], [0, 0, 1, 1], [], []>} : vector<25x8xbf16>, vector<8x7xbf16>, vector<25x7xf32> -> vector<25x7xf32>
    %88 = arith.addf %78, %87 : vector<25x7xf32>
    %c0_77 = arith.constant 0 : index
    %c0_78 = arith.constant 0 : index
    %89 = vector.load %arg4[%c0_77, %c0_78] : memref<1x7xf32, #tpu.memory_space<vmem>>, vector<1x7xf32>
    %90 = vector.broadcast %89 : vector<1x7xf32> to vector<25x7xf32>
    %91 = arith.addf %88, %90 : vector<25x7xf32>
    %92 = vector.shape_cast %91 : vector<25x7xf32> to vector<1x5x5x7xf32>
    %93 = arith.truncf %92 : vector<1x5x5x7xf32> to vector<1x5x5x7xbf16>
    %c0_79 = arith.constant 0 : index
    %c0_80 = arith.constant 0 : index
    %c0_81 = arith.constant 0 : index
    %c0_82 = arith.constant 0 : index
    %94 = vector.load %arg5[%c0_79, %c0_80, %c0_81, %c0_82] : memref<1x5x5x7xbf16, #tpu.memory_space<vmem>>, vector<1x5x5x7xbf16>
    tpu.vector_store %arg5[%c0_79, %c0_80, %c0_81, %c0_82], %93 {strides = array<i32>} : memref<1x5x5x7xbf16, #tpu.memory_space<vmem>>, vector<1x5x5x7xbf16>,
    return
  }
  func.func @transform_0(%arg0: i32, %arg1: i32) -> (i32, i32, i32, i32, i32) {
    %c0_i32 = arith.constant 0 : i32
    %c0_i32_0 = arith.constant 0 : i32
    %c0_i32_1 = arith.constant 0 : i32
    %c0_i32_2 = arith.constant 0 : i32
    %c0_i32_3 = arith.constant 0 : i32
    return %arg0, %c0_i32, %c0_i32_0, %c0_i32_1, %c0_i32_2 : i32, i32, i32, i32, i32
  }
  func.func @transform_1(%arg0: i32, %arg1: i32) -> (i32, i32, i32) {
    %c0_i32 = arith.constant 0 : i32
    %c0_i32_0 = arith.constant 0 : i32
    %c0_i32_1 = arith.constant 0 : i32
    %c0_i32_2 = arith.constant 0 : i32
    return %c0_i32, %c0_i32_0, %c0_i32_1 : i32, i32, i32
  }
  func.func @transform_2(%arg0: i32, %arg1: i32) -> (i32, i32) {
    %c0_i32 = arith.constant 0 : i32
    %c0_i32_0 = arith.constant 0 : i32
    %c0_i32_1 = arith.constant 0 : i32
    return %c0_i32, %c0_i32_0 : i32, i32
  }
  func.func @transform_3(%arg0: i32, %arg1: i32) -> (i32, i32, i32, i32) {
    %c0_i32 = arith.constant 0 : i32
    %c0_i32_0 = arith.constant 0 : i32
    %c0_i32_1 = arith.constant 0 : i32
    return %arg0, %arg1, %c0_i32, %c0_i32_0 : i32, i32, i32, i32
  }
}

</mosaic_0001>

<llo_original>
// kernel: tpu_custom_call.1
$region0: #{tpu_custom_call.1}
  #allocation0 [shape = 'u32[]', space=smem, size = 0x4, offset = 0x4, fixed_abs, tag = 'smem constant byte address 0x4 - core index']
  #allocation1 [shape = 'u32[72,128]{1,0:T(1,128)}', space=vmem, size = 0x9000, scoped, tag = 'internal scratch']
  %s0 = inlined_call_operand.vmem [shape: bf16[2,4,6,6,8], index: 0, kind: input, shape index: {}]
  %s1 = inlined_call_operand.vmem [shape: bf16[9,8,7], index: 1, kind: input, shape index: {}]
  %s2 = inlined_call_operand.vmem [shape: f32[1,7], index: 2, kind: input, shape index: {}]
  %s3 = inlined_call_operand.vmem [shape: bf16[2,5,5,7], index: 3, kind: output, shape index: {}]
  %s4 = sld [smem:[#allocation0]]
  $region45: #{tpu_custom_call.1} parent=0
    _
  %s6 = ssub.s32 1, %s4
  %s7 = scalar_select 0, %s6, %s4
  loop: start=0, step=1, limit=4
  $region2: #{tpu_custom_call.1} parent=0 // loop_pre_header
    _
  $region3: #{tpu_custom_call.1} parent=0 // loop_header
    %s9 = sphi 0, %s13
    %p10 = scmp.ge.s32.totalorder %s9, 4
    %s16 = sphi 0, %s28
    %s17 = sphi 0, %s24
    %s18 = sphi 0, %s16
    %s19 = sphi 0, %s17
    %s20 = sphi 0, %s18
    %s21 = sphi 0, %s19
    %s31 = sphi 0, %s33
    %s34 = sphi 0, %s31
    %s35 = sphi 0, %s34
    %s51 = sphi 0, %s35
    %s55 = sphi 0, %s55
    %s57 = sphi 0, %s55
    %s58 = sphi 0, %s57
    %s72 = sphi 0, %s58
    %s76 = sphi 0, %s76
    %s78 = sphi 0, %s76
    %s79 = sphi 0, %s78
    %s93 = sphi 0, %s79
    %s101 = sphi 0, %s103
    %s104 = sphi 0, %s101
    %s105 = sphi 0, %s104
    %s121 = sphi 0, %s105
  $region4: #{tpu_custom_call.1} parent=0 // loop_header_branch
    %12 = sbr.rel (%p10) target = $region8
  $region5: #{tpu_custom_call.1} parent=0 // loop_body
    %s14 = ssub.s32 %s9, 1
    %s15 = ssub.s32 %s9, 2
    %s22 = sadd.s32 1, %s17
    %p23 = scmp.ge.s32.totalorder %s22, 1
    %s24 = scalar_select %p23, 0, %s22
    %s25 = sadd.s32 1, %s16
    %s26 = scalar_select %p23, %s25, %s16
    %p27 = scmp.ge.s32.totalorder %s26, 2
    %s28 = scalar_select %p27, 0, %s26
    %s29 = ssub.s32 %s16, %s28
    %p30 = scmp.eq.s32.totalorder %s29, 0
    %s32 = sadd.s32 %s31, 1
    %s33 = scalar_select %p30, %s31, %s32
    %p36 = pneg %p30
    %p37 = scmp.eq.s32.totalorder %s9, 1
    %p38 = por %p36, %p37
    %p39 = scmp.ne.s32.totalorder %s31, %s34
    %p40 = scmp.eq.s32.totalorder %s9, 0
    %p41 = por %p39, %p40
    %p42 = scmp.ne.s32.totalorder %s31, %s34
    %p43 = scmp.eq.s32.totalorder %s14, 1
    %p44 = por %p42, %p43
    %p45 = scmp.ne.s32.totalorder %s34, %s35
    %p46 = scmp.eq.s32.totalorder %s14, 0
    %p47 = por %p45, %p46
    %p48 = scmp.ne.s32.totalorder %s34, %s35
    %p49 = scmp.eq.s32.totalorder %s15, 1
    %p50 = por %p48, %p49
    %p52 = scmp.ne.s32.totalorder %s35, %s51
    %p53 = scmp.eq.s32.totalorder %s15, 0
    %p54 = por %p52, %p53
    %s56 = sadd.s32 %s55, 1
    %p59 = scmp.eq.s32.totalorder %s9, 1
    %p60 = scmp.ne.s32.totalorder %s55, %s57
    %p61 = scmp.eq.s32.totalorder %s9, 0
    %p62 = por %p60, %p61
    %p63 = scmp.ne.s32.totalorder %s55, %s57
    %p64 = scmp.eq.s32.totalorder %s14, 1
    %p65 = por %p63, %p64
    %p66 = scmp.ne.s32.totalorder %s57, %s58
    %p67 = scmp.eq.s32.totalorder %s14, 0
    %p68 = por %p66, %p67
    %p69 = scmp.ne.s32.totalorder %s57, %s58
    %p70 = scmp.eq.s32.totalorder %s15, 1
    %p71 = por %p69, %p70
    %p73 = scmp.ne.s32.totalorder %s58, %s72
    %p74 = scmp.eq.s32.totalorder %s15, 0
    %p75 = por %p73, %p74
    %s77 = sadd.s32 %s76, 1
    %p80 = scmp.eq.s32.totalorder %s9, 1
    %p81 = scmp.ne.s32.totalorder %s76, %s78
    %p82 = scmp.eq.s32.totalorder %s9, 0
    %p83 = por %p81, %p82
    %p84 = scmp.ne.s32.totalorder %s76, %s78
    %p85 = scmp.eq.s32.totalorder %s14, 1
    %p86 = por %p84, %p85
    %p87 = scmp.ne.s32.totalorder %s78, %s79
    %p88 = scmp.eq.s32.totalorder %s14, 0
    %p89 = por %p87, %p88
    %p90 = scmp.ne.s32.totalorder %s78, %s79
    %p91 = scmp.eq.s32.totalorder %s15, 1
    %p92 = por %p90, %p91
    %p94 = scmp.ne.s32.totalorder %s79, %s93
    %p95 = scmp.eq.s32.totalorder %s15, 0
    %p96 = por %p94, %p95
    %s97 = ssub.s32 %s16, %s28
    %s98 = ssub.s32 %s17, %s24
    %s99 = sor.u32 %s97, %s98
    %p100 = scmp.eq.s32.totalorder %s99, 0
    %s102 = sadd.s32 %s101, 1
    %s103 = scalar_select %p100, %s101, %s102
    %p106 = pneg %p100
    %p107 = scmp.eq.s32.totalorder %s9, 1
    %p108 = por %p106, %p107
    %p109 = scmp.ne.s32.totalorder %s101, %s104
    %p110 = scmp.eq.s32.totalorder %s9, 0
    %p111 = por %p109, %p110
    %p112 = scmp.ne.s32.totalorder %s101, %s104
    %p113 = scmp.eq.s32.totalorder %s14, 1
    %p114 = por %p112, %p113
    %p115 = scmp.ne.s32.totalorder %s104, %s105
    %p116 = scmp.eq.s32.totalorder %s14, 0
    %p117 = por %p115, %p116
    %p118 = scmp.ne.s32.totalorder %s104, %s105
    %p119 = scmp.eq.s32.totalorder %s15, 1
    %p120 = por %p118, %p119
    %p122 = scmp.ne.s32.totalorder %s105, %s121
    %p123 = scmp.eq.s32.totalorder %s15, 0
    %p124 = por %p122, %p123
    %p125 = scmp.le.s32.totalorder 1, %s9
    %p126 = scmp.lt.s32.totalorder %s9, 3
    %p127 = pnand %p125, %p126
    %p128 = pneg %p127
    // Predicated region
    $region9: #{tpu_custom_call.1} parent=5 // pred_check
      _
    $region10: #{tpu_custom_call.1} parent=5 // pred_check_branch
      %130 = sbr.rel (%p127) target = $region12
    $region11: #{tpu_custom_call.1} parent=5 // pred_region
      %s131 = ssub.s32 %s9, 1
      // Predicated region
      $region13: #{tpu_custom_call.1} parent=11 // pred_check
        %p132 = pneg %p68
      $region14: #{tpu_custom_call.1} parent=11 // pred_check_branch
        %134 = sbr.rel (%p132) target = $region16
      $region15: #{tpu_custom_call.1} parent=11 // pred_region
        _
      $region16: #{tpu_custom_call.1} parent=11 // pred_fallthru
        _
      // Predicated region
      $region17: #{tpu_custom_call.1} parent=11 // pred_check
        %p135 = pneg %p89
      $region18: #{tpu_custom_call.1} parent=11 // pred_check_branch
        %137 = sbr.rel (%p135) target = $region20
      $region19: #{tpu_custom_call.1} parent=11 // pred_region
        _
      $region20: #{tpu_custom_call.1} parent=11 // pred_fallthru
        _
    $region12: #{tpu_custom_call.1} parent=5 // pred_fallthru
      _
    %p138 = scmp.lt.s32.totalorder %s9, 2
    // Predicated region
    $region21: #{tpu_custom_call.1} parent=5 // pred_check
      %p139 = pneg %p138
    $region22: #{tpu_custom_call.1} parent=5 // pred_check_branch
      %141 = sbr.rel (%p139) target = $region24
    $region23: #{tpu_custom_call.1} parent=5 // pred_region
      // Predicated region
      $region25: #{tpu_custom_call.1} parent=23 // pred_check
        %p142 = pneg %p41
      $region26: #{tpu_custom_call.1} parent=23 // pred_check_branch
        %144 = sbr.rel (%p142) target = $region28
      $region27: #{tpu_custom_call.1} parent=23 // pred_region
        %p145 = scmp.lt.s32.totalorder %s16, 1
        %s146 = scalar_select %p145, %s16, 1
        %s147 = smul.addr %s146, 24
        %s148 = smul.addr %s147, 4
        %s149 = scalar_lea.vmem %s0, %s148
      $region28: #{tpu_custom_call.1} parent=23 // pred_fallthru
        _
    $region24: #{tpu_custom_call.1} parent=5 // pred_fallthru
      _
    %p150 = scmp.le.s32.totalorder 1, %s9
    %p151 = scmp.lt.s32.totalorder %s9, 3
    %p152 = pnand %p150, %p151
    %p153 = pneg %p152
    // Predicated region
    $region29: #{tpu_custom_call.1} parent=5 // pred_check
      _
    $region30: #{tpu_custom_call.1} parent=5 // pred_check_branch
      %155 = sbr.rel (%p152) target = $region32
    $region31: #{tpu_custom_call.1} parent=5 // pred_region
      %s156 = ssub.s32 %s9, 1
      %p157 = scmp.lt.s32.totalorder %s18, 1
      %s158 = scalar_select %p157, %s18, 1
      %s159 = smul.addr %s158, 24
      %s160 = smul.addr %s159, 4
      %s161 = scalar_lea.vmem %s0, %s160
      %p162 = pneg %p47
      %p163 = pneg %p44
      %p164 = pneg %p68
      %p165 = pneg %p65
      %p166 = pneg %p89
      %p167 = pneg %p86
      %p168 = pneg %p117
      %p169 = pneg %p114
      %s170 = smul.u32 5, %s19
      %p171 = scmp.lt.s32.totalorder %s18, 1
      %s172 = scalar_select %p171, %s18, 1
      %p173 = scmp.lt.s32.totalorder %s170, 4
      %s174 = scalar_select %p173, %s170, 4
      %s175 = smul.addr %s172, 5
      %s176 = sadd.s32 %s174, %s175
      %s177 = smul.addr %s176, 4
      %s178 = scalar_lea.vmem %s3, %s177
      %p179 = scmp.lt.s32.totalorder %s18, 1
      %s180 = scalar_select %p179, %s18, 1
      %s181 = smul.addr %s180, 24
      %s182 = smul.addr %s181, 4
      %s183 = scalar_lea.vmem %s0, %s182
      %s184 = smul.u32 5, %s19
      %p185 = scmp.lt.s32.totalorder %s18, 1
      %s186 = scalar_select %p185, %s18, 1
      %p187 = scmp.lt.s32.totalorder %s184, 4
      %s188 = scalar_select %p187, %s184, 4
      %s189 = smul.addr %s186, 5
      %s190 = sadd.s32 %s188, %s189
      %s191 = smul.addr %s190, 4
      %s192 = scalar_lea.vmem %s3, %s191
      %s193 = smul.u32 5, %s19
      %s195 = smul.u32 %s19, 5
      %s196 = smul.addr %s195, 4
      %s197 = scalar_lea.vmem %s183, %s196
      %v198 = vld [vmem:[%s197] sm:$0x7]
      %v199 = vld [vmem:[%s197 + $0x4] sm:$0x7]
      %v200 = vld [vmem:[%s197 + $0x8] sm:$0x7]
      %v201 = vld [vmem:[%s197 + $0xc] sm:$0x7]
      %v202 = vld [vmem:[%s197 + $0x10] sm:$0x7]
      %v208 = vrot.slane %v198, 3
      %v209 = vrot.slane %v199, 3
      %v210 = vrot.slane %v200, 3
      %v211 = vrot.slane %v201, 3
      %v212 = vrot.slane %v202, 3
      %vm213 = vcmask 1040384
      %v216 = vsel %vm213, %v198, %v208
      %vm218 = vcmask 1041409
      %v219 = vsel %vm218, %v198, %v208
      %v221 = vrot.slane %v219, 1
      %vm222 = vcmask 1042434
      %v223 = vsel %vm222, %v198, %v208
      %v225 = vrot.slane %v223, 2
      %v228 = vsel %vm213, %v199, %v209
      %v230 = vsel %vm218, %v199, %v209
      %v232 = vrot.slane %v230, 1
      %v233 = vsel %vm222, %v199, %v209
      %v235 = vrot.slane %v233, 2
      %v238 = vsel %vm213, %v200, %v210
      %v240 = vsel %vm218, %v200, %v210
      %v242 = vrot.slane %v240, 1
      %v243 = vsel %vm222, %v200, %v210
      %v245 = vrot.slane %v243, 2
      %v248 = vsel %vm213, %v201, %v211
      %v250 = vsel %vm218, %v201, %v211
      %v252 = vrot.slane %v250, 1
      %v253 = vsel %vm222, %v201, %v211
      %v255 = vrot.slane %v253, 2
      %v258 = vsel %vm213, %v202, %v212
      %v260 = vsel %vm218, %v202, %v212
      %v262 = vrot.slane %v260, 1
      %v263 = vsel %vm222, %v202, %v212
      %v265 = vrot.slane %v263, 2
      %v266 = vunpack.i.l.s16 %v216
      %v267 = vunpack.i.h.s16 %v216
      %v268 = vunpack.i.l.s16 %v221
      %v269 = vunpack.i.h.s16 %v221
      %v270 = vunpack.i.l.s16 %v225
      %v271 = vunpack.i.l.s16 %v228
      %v272 = vunpack.i.h.s16 %v228
      %v273 = vunpack.i.l.s16 %v232
      %v274 = vunpack.i.h.s16 %v232
      %v275 = vunpack.i.l.s16 %v235
      %v276 = vunpack.i.l.s16 %v238
      %v277 = vunpack.i.h.s16 %v238
      %v278 = vunpack.i.l.s16 %v242
      %v279 = vunpack.i.h.s16 %v242
      %v280 = vunpack.i.l.s16 %v245
      %v281 = vunpack.i.l.s16 %v248
      %v282 = vunpack.i.h.s16 %v248
      %v283 = vunpack.i.l.s16 %v252
      %v284 = vunpack.i.h.s16 %v252
      %v285 = vunpack.i.l.s16 %v255
      %v286 = vunpack.i.l.s16 %v258
      %v287 = vunpack.i.h.s16 %v258
      %v288 = vunpack.i.l.s16 %v262
      %v289 = vunpack.i.h.s16 %v262
      %v290 = vunpack.i.l.s16 %v265
      %v291 = vld [vmem:[%s1] sm:$0xf]
      %s292 = sadd.s32 %s195, 6
      %s293 = smul.addr %s292, 4
      %s294 = scalar_lea.vmem %s183, %s293
      %v295 = vld [vmem:[%s294] sm:$0x7]
      %v296 = vld [vmem:[%s294 + $0x4] sm:$0x7]
      %v297 = vld [vmem:[%s294 + $0x8] sm:$0x7]
      %v298 = vld [vmem:[%s294 + $0xc] sm:$0x7]
      %v299 = vld [vmem:[%s294 + $0x10] sm:$0x7]
      %v305 = vrot.slane %v295, 3
      %v306 = vrot.slane %v296, 3
      %v307 = vrot.slane %v297, 3
      %v308 = vrot.slane %v298, 3
      %v309 = vrot.slane %v299, 3
      %v312 = vsel %vm213, %v295, %v305
      %v314 = vsel %vm218, %v295, %v305
      %v316 = vrot.slane %v314, 1
      %v317 = vsel %vm222, %v295, %v305
      %v319 = vrot.slane %v317, 2
      %v322 = vsel %vm213, %v296, %v306
      %v324 = vsel %vm218, %v296, %v306
      %v326 = vrot.slane %v324, 1
      %v327 = vsel %vm222, %v296, %v306
      %v329 = vrot.slane %v327, 2
      %v332 = vsel %vm213, %v297, %v307
      %v334 = vsel %vm218, %v297, %v307
      %v336 = vrot.slane %v334, 1
      %v337 = vsel %vm222, %v297, %v307
      %v339 = vrot.slane %v337, 2
      %v342 = vsel %vm213, %v298, %v308
      %v344 = vsel %vm218, %v298, %v308
      %v346 = vrot.slane %v344, 1
      %v347 = vsel %vm222, %v298, %v308
      %v349 = vrot.slane %v347, 2
      %v352 = vsel %vm213, %v299, %v309
      %v354 = vsel %vm218, %v299, %v309
      %v356 = vrot.slane %v354, 1
      %v357 = vsel %vm222, %v299, %v309
      %v359 = vrot.slane %v357, 2
      %v360 = vunpack.i.l.s16 %v312
      %v361 = vunpack.i.h.s16 %v312
      %v362 = vunpack.i.l.s16 %v316
      %v363 = vunpack.i.h.s16 %v316
      %v364 = vunpack.i.l.s16 %v319
      %v365 = vunpack.i.l.s16 %v322
      %v366 = vunpack.i.h.s16 %v322
      %v367 = vunpack.i.l.s16 %v326
      %v368 = vunpack.i.h.s16 %v326
      %v369 = vunpack.i.l.s16 %v329
      %v370 = vunpack.i.l.s16 %v332
      %v371 = vunpack.i.h.s16 %v332
      %v372 = vunpack.i.l.s16 %v336
      %v373 = vunpack.i.h.s16 %v336
      %v374 = vunpack.i.l.s16 %v339
      %v375 = vunpack.i.l.s16 %v342
      %v376 = vunpack.i.h.s16 %v342
      %v377 = vunpack.i.l.s16 %v346
      %v378 = vunpack.i.h.s16 %v346
      %v379 = vunpack.i.l.s16 %v349
      %v380 = vunpack.i.l.s16 %v352
      %v381 = vunpack.i.h.s16 %v352
      %v382 = vunpack.i.l.s16 %v356
      %v383 = vunpack.i.h.s16 %v356
      %v384 = vunpack.i.l.s16 %v359
      %s385 = scalar_lea.vmem %s1, 4
      %v386 = vld [vmem:[%s385] sm:$0xf]
      %v387 = vpack.i.b16 %v361, %v360
      %v388 = vpack.i.b16 %v363, %v362
      %v389 = vpack.i.b16 %v365, %v364
      %v390 = vpack.i.b16 %v367, %v366
      %v391 = vpack.i.b16 %v369, %v368
      %v392 = vpack.i.b16 %v371, %v370
      %v393 = vpack.i.b16 %v373, %v372
      %v394 = vpack.i.b16 %v375, %v374
      %v395 = vpack.i.b16 %v377, %v376
      %v396 = vpack.i.b16 %v379, %v378
      %v397 = vpack.i.b16 %v381, %v380
      %v398 = vpack.i.b16 %v383, %v382
      %401 = vst [vmem:[#allocation1] ss:$9 sm:$0xff] %v387
      %s403 = scalar_lea.vmem [#allocation1], 1
      %404 = vst [vmem:[%s403] ss:$9 sm:$0xff] %v388
      %s406 = scalar_lea.vmem [#allocation1], 2
      %407 = vst [vmem:[%s406] ss:$9 sm:$0xff] %v389
      %s409 = scalar_lea.vmem [#allocation1], 3
      %410 = vst [vmem:[%s409] ss:$9 sm:$0xff] %v390
      %s412 = scalar_lea.vmem [#allocation1], 4
      %413 = vst [vmem:[%s412] ss:$9 sm:$0xff] %v391
      %s415 = scalar_lea.vmem [#allocation1], 5
      %416 = vst [vmem:[%s415] ss:$9 sm:$0xff] %v392
      %s418 = scalar_lea.vmem [#allocation1], 6
      %419 = vst [vmem:[%s418] ss:$9 sm:$0xff] %v393
      %s421 = scalar_lea.vmem [#allocation1], 7
      %422 = vst [vmem:[%s421] ss:$9 sm:$0xff] %v394
      %v423 = vld [vmem:[#allocation1] sm:$0xff]
      %425 = vst [vmem:[#allocation1] ss:$9 sm:$0xff] %v395
      %427 = vst [vmem:[%s403] ss:$9 sm:$0xff] %v396
      %429 = vst [vmem:[%s406] ss:$9 sm:$0xff] %v397
      %431 = vst [vmem:[%s409] ss:$9 sm:$0xff] %v398
      %433 = vst [vmem:[%s412] ss:$9 sm:$0xff] %v384
      %v434 = vld [vmem:[#allocation1] sm:$0xff]
      %vm435 = vcmask 64512
      %v436 = vsel %vm435, %v423, 0
      %v438 = vsel %vm435, %v434, 0
      %vm440 = vcmask 1043456
      %v442 = vsel %vm440, %v386, 0
      %444 = vmatpush.bf16.msra.mxu0 0
      %445 = vmatpush.bf16.msra.mxu0 0
      %446 = vmatpush.bf16.msra.mxu0 0
      %447 = vmatpush.bf16.msra.mxu0 0
      %448 = vmatpush.bf16.msra.mxu0 0
      %449 = vmatpush.bf16.msra.mxu0 0
      %450 = vmatpush.bf16.msra.mxu0 0
      %451 = vmatpush.bf16.msra.mxu0 %v442
      %452 = vmatmul.bf16.gmra.mxu0 %v436
      %v453 = vpop.f32.mrf.mxu0
      %v454 = vadd.f32 0.0, %v453
      %v455 = vpop.f32.mrf.mxu0
      %v456 = vadd.f32 0.0, %v455
      %457 = vmatmul.bf16.gmra.mxu0 %v438
      %v458 = vpop.f32.mrf.mxu0
      %v459 = vadd.f32 0.0, %v458
      %v460 = vpop.f32.mrf.mxu0
      %v461 = vadd.f32 0.0, %v460
      %462 = vdwg.mxu0
      %v463 = vpack.i.b16 %v267, %v266
      %v464 = vpack.i.b16 %v269, %v268
      %v465 = vpack.i.b16 %v271, %v270
      %v466 = vpack.i.b16 %v273, %v272
      %v467 = vpack.i.b16 %v275, %v274
      %v468 = vpack.i.b16 %v277, %v276
      %v469 = vpack.i.b16 %v279, %v278
      %v470 = vpack.i.b16 %v281, %v280
      %v471 = vpack.i.b16 %v283, %v282
      %v472 = vpack.i.b16 %v285, %v284
      %v473 = vpack.i.b16 %v287, %v286
      %v474 = vpack.i.b16 %v289, %v288
      %477 = vst [vmem:[#allocation1] ss:$9 sm:$0xff] %v463
      %s479 = scalar_lea.vmem [#allocation1], 1
      %480 = vst [vmem:[%s479] ss:$9 sm:$0xff] %v464
      %s482 = scalar_lea.vmem [#allocation1], 2
      %483 = vst [vmem:[%s482] ss:$9 sm:$0xff] %v465
      %s485 = scalar_lea.vmem [#allocation1], 3
      %486 = vst [vmem:[%s485] ss:$9 sm:$0xff] %v466
      %s488 = scalar_lea.vmem [#allocation1], 4
      %489 = vst [vmem:[%s488] ss:$9 sm:$0xff] %v467
      %s491 = scalar_lea.vmem [#allocation1], 5
      %492 = vst [vmem:[%s491] ss:$9 sm:$0xff] %v468
      %s494 = scalar_lea.vmem [#allocation1], 6
      %495 = vst [vmem:[%s494] ss:$9 sm:$0xff] %v469
      %s497 = scalar_lea.vmem [#allocation1], 7
      %498 = vst [vmem:[%s497] ss:$9 sm:$0xff] %v470
      %v499 = vld [vmem:[#allocation1] sm:$0xff]
      %501 = vst [vmem:[#allocation1] ss:$9 sm:$0xff] %v471
      %503 = vst [vmem:[%s479] ss:$9 sm:$0xff] %v472
      %505 = vst [vmem:[%s482] ss:$9 sm:$0xff] %v473
      %507 = vst [vmem:[%s485] ss:$9 sm:$0xff] %v474
      %509 = vst [vmem:[%s488] ss:$9 sm:$0xff] %v290
      %v510 = vld [vmem:[#allocation1] sm:$0xff]
      %v511 = vsel %vm435, %v499, 0
      %v513 = vsel %vm435, %v510, 0
      %v516 = vsel %vm440, %v291, 0
      %518 = vmatpush.bf16.msra.mxu0 0
      %519 = vmatpush.bf16.msra.mxu0 0
      %520 = vmatpush.bf16.msra.mxu0 0
      %521 = vmatpush.bf16.msra.mxu0 0
      %522 = vmatpush.bf16.msra.mxu0 0
      %523 = vmatpush.bf16.msra.mxu0 0
      %524 = vmatpush.bf16.msra.mxu0 0
      %525 = vmatpush.bf16.msra.mxu0 %v516
      %526 = vmatmul.bf16.gmra.mxu0 %v511
      %v527 = vpop.f32.mrf.mxu0
      %v528 = vadd.f32 %v454, %v527
      %v529 = vpop.f32.mrf.mxu0
      %v530 = vadd.f32 %v456, %v529
      %531 = vmatmul.bf16.gmra.mxu0 %v513
      %v532 = vpop.f32.mrf.mxu0
      %v533 = vadd.f32 %v459, %v532
      %v534 = vpop.f32.mrf.mxu0
      %v535 = vadd.f32 %v461, %v534
      %536 = vdwg.mxu0
      %v537 = vld [vmem:[%s197] sm:$0x7]
      %v538 = vld [vmem:[%s197 + $0x4] sm:$0x7]
      %v539 = vld [vmem:[%s197 + $0x8] sm:$0x7]
      %v540 = vld [vmem:[%s197 + $0xc] sm:$0x7]
      %v541 = vld [vmem:[%s197 + $0x10] sm:$0x7]
      %v547 = vrot.slane %v537, 3
      %v548 = vrot.slane %v538, 3
      %v549 = vrot.slane %v539, 3
      %v550 = vrot.slane %v540, 3
      %v551 = vrot.slane %v541, 3
      %v554 = vsel %vm213, %v537, %v547
      %v556 = vsel %vm218, %v537, %v547
      %v558 = vrot.slane %v556, 1
      %v559 = vsel %vm222, %v537, %v547
      %v561 = vrot.slane %v559, 2
      %v564 = vsel %vm213, %v538, %v548
      %v566 = vsel %vm218, %v538, %v548
      %v568 = vrot.slane %v566, 1
      %v569 = vsel %vm222, %v538, %v548
      %v571 = vrot.slane %v569, 2
      %v574 = vsel %vm213, %v539, %v549
      %v576 = vsel %vm218, %v539, %v549
      %v578 = vrot.slane %v576, 1
      %v579 = vsel %vm222, %v539, %v549
      %v581 = vrot.slane %v579, 2
      %v584 = vsel %vm213, %v540, %v550
      %v586 = vsel %vm218, %v540, %v550
      %v588 = vrot.slane %v586, 1
      %v589 = vsel %vm222, %v540, %v550
      %v591 = vrot.slane %v589, 2
      %v594 = vsel %vm213, %v541, %v551
      %v596 = vsel %vm218, %v541, %v551
      %v598 = vrot.slane %v596, 1
      %v599 = vsel %vm222, %v541, %v551
      %v601 = vrot.slane %v599, 2
      %v602 = vunpack.i.h.s16 %v554
      %v603 = vunpack.i.l.s16 %v558
      %v604 = vunpack.i.h.s16 %v558
      %v605 = vunpack.i.l.s16 %v561
      %v606 = vunpack.i.h.s16 %v561
      %v607 = vunpack.i.h.s16 %v564
      %v608 = vunpack.i.l.s16 %v568
      %v609 = vunpack.i.h.s16 %v568
      %v610 = vunpack.i.l.s16 %v571
      %v611 = vunpack.i.h.s16 %v571
      %v612 = vunpack.i.h.s16 %v574
      %v613 = vunpack.i.l.s16 %v578
      %v614 = vunpack.i.h.s16 %v578
      %v615 = vunpack.i.l.s16 %v581
      %v616 = vunpack.i.h.s16 %v581
      %v617 = vunpack.i.h.s16 %v584
      %v618 = vunpack.i.l.s16 %v588
      %v619 = vunpack.i.h.s16 %v588
      %v620 = vunpack.i.l.s16 %v591
      %v621 = vunpack.i.h.s16 %v591
      %v622 = vunpack.i.h.s16 %v594
      %v623 = vunpack.i.l.s16 %v598
      %v624 = vunpack.i.h.s16 %v598
      %v625 = vunpack.i.l.s16 %v601
      %v626 = vunpack.i.h.s16 %v601
      %s627 = scalar_lea.vmem %s1, 8
      %v628 = vld [vmem:[%s627] sm:$0xf]
      %v629 = vpack.i.b16 %v603, %v602
      %v630 = vpack.i.b16 %v605, %v604
      %v631 = vpack.i.b16 %v607, %v606
      %v632 = vpack.i.b16 %v609, %v608
      %v633 = vpack.i.b16 %v611, %v610
      %v634 = vpack.i.b16 %v613, %v612
      %v635 = vpack.i.b16 %v615, %v614
      %v636 = vpack.i.b16 %v617, %v616
      %v637 = vpack.i.b16 %v619, %v618
      %v638 = vpack.i.b16 %v621, %v620
      %v639 = vpack.i.b16 %v623, %v622
      %v640 = vpack.i.b16 %v625, %v624
      %643 = vst [vmem:[#allocation1] ss:$9 sm:$0xff] %v629
      %s645 = scalar_lea.vmem [#allocation1], 1
      %646 = vst [vmem:[%s645] ss:$9 sm:$0xff] %v630
      %s648 = scalar_lea.vmem [#allocation1], 2
      %649 = vst [vmem:[%s648] ss:$9 sm:$0xff] %v631
      %s651 = scalar_lea.vmem [#allocation1], 3
      %652 = vst [vmem:[%s651] ss:$9 sm:$0xff] %v632
      %s654 = scalar_lea.vmem [#allocation1], 4
      %655 = vst [vmem:[%s654] ss:$9 sm:$0xff] %v633
      %s657 = scalar_lea.vmem [#allocation1], 5
      %658 = vst [vmem:[%s657] ss:$9 sm:$0xff] %v634
      %s660 = scalar_lea.vmem [#allocation1], 6
      %661 = vst [vmem:[%s660] ss:$9 sm:$0xff] %v635
      %s663 = scalar_lea.vmem [#allocation1], 7
      %664 = vst [vmem:[%s663] ss:$9 sm:$0xff] %v636
      %v665 = vld [vmem:[#allocation1] sm:$0xff]
      %667 = vst [vmem:[#allocation1] ss:$9 sm:$0xff] %v637
      %669 = vst [vmem:[%s645] ss:$9 sm:$0xff] %v638
      %671 = vst [vmem:[%s648] ss:$9 sm:$0xff] %v639
      %673 = vst [vmem:[%s651] ss:$9 sm:$0xff] %v640
      %675 = vst [vmem:[%s654] ss:$9 sm:$0xff] %v626
      %v676 = vld [vmem:[#allocation1] sm:$0xff]
      %v677 = vsel %vm435, %v665, 0
      %v679 = vsel %vm435, %v676, 0
      %v682 = vsel %vm440, %v628, 0
      %684 = vmatpush.bf16.msra.mxu0 0
      %685 = vmatpush.bf16.msra.mxu0 0
      %686 = vmatpush.bf16.msra.mxu0 0
      %687 = vmatpush.bf16.msra.mxu0 0
      %688 = vmatpush.bf16.msra.mxu0 0
      %689 = vmatpush.bf16.msra.mxu0 0
      %690 = vmatpush.bf16.msra.mxu0 0
      %691 = vmatpush.bf16.msra.mxu0 %v682
      %692 = vmatmul.bf16.gmra.mxu0 %v677
      %v693 = vpop.f32.mrf.mxu0
      %v694 = vadd.f32 0.0, %v693
      %v695 = vpop.f32.mrf.mxu0
      %v696 = vadd.f32 0.0, %v695
      %697 = vmatmul.bf16.gmra.mxu0 %v679
      %v698 = vpop.f32.mrf.mxu0
      %v699 = vadd.f32 0.0, %v698
      %v700 = vpop.f32.mrf.mxu0
      %v701 = vadd.f32 0.0, %v700
      %702 = vdwg.mxu0
      %v703 = vadd.f32 %v528, %v694
      %v704 = vadd.f32 %v530, %v696
      %v705 = vadd.f32 %v533, %v699
      %v706 = vadd.f32 %v535, %v701
      %s707 = sadd.s32 %s195, 12
      %s708 = smul.addr %s707, 4
      %s709 = scalar_lea.vmem %s183, %s708
      %v710 = vld [vmem:[%s709] sm:$0x7]
      %v711 = vld [vmem:[%s709 + $0x4] sm:$0x7]
      %v712 = vld [vmem:[%s709 + $0x8] sm:$0x7]
      %v713 = vld [vmem:[%s709 + $0xc] sm:$0x7]
      %v714 = vld [vmem:[%s709 + $0x10] sm:$0x7]
      %v720 = vrot.slane %v710, 3
      %v721 = vrot.slane %v711, 3
      %v722 = vrot.slane %v712, 3
      %v723 = vrot.slane %v713, 3
      %v724 = vrot.slane %v714, 3
      %v727 = vsel %vm213, %v710, %v720
      %v729 = vsel %vm218, %v710, %v720
      %v731 = vrot.slane %v729, 1
      %v732 = vsel %vm222, %v710, %v720
      %v734 = vrot.slane %v732, 2
      %v737 = vsel %vm213, %v711, %v721
      %v739 = vsel %vm218, %v711, %v721
      %v741 = vrot.slane %v739, 1
      %v742 = vsel %vm222, %v711, %v721
      %v744 = vrot.slane %v742, 2
      %v747 = vsel %vm213, %v712, %v722
      %v749 = vsel %vm218, %v712, %v722
      %v751 = vrot.slane %v749, 1
      %v752 = vsel %vm222, %v712, %v722
      %v754 = vrot.slane %v752, 2
      %v757 = vsel %vm213, %v713, %v723
      %v759 = vsel %vm218, %v713, %v723
      %v761 = vrot.slane %v759, 1
      %v762 = vsel %vm222, %v713, %v723
      %v764 = vrot.slane %v762, 2
      %v767 = vsel %vm213, %v714, %v724
      %v769 = vsel %vm218, %v714, %v724
      %v771 = vrot.slane %v769, 1
      %v772 = vsel %vm222, %v714, %v724
      %v774 = vrot.slane %v772, 2
      %v775 = vunpack.i.l.s16 %v727
      %v776 = vunpack.i.h.s16 %v727
      %v777 = vunpack.i.l.s16 %v731
      %v778 = vunpack.i.h.s16 %v731
      %v779 = vunpack.i.l.s16 %v734
      %v780 = vunpack.i.l.s16 %v737
      %v781 = vunpack.i.h.s16 %v737
      %v782 = vunpack.i.l.s16 %v741
      %v783 = vunpack.i.h.s16 %v741
      %v784 = vunpack.i.l.s16 %v744
      %v785 = vunpack.i.l.s16 %v747
      %v786 = vunpack.i.h.s16 %v747
      %v787 = vunpack.i.l.s16 %v751
      %v788 = vunpack.i.h.s16 %v751
      %v789 = vunpack.i.l.s16 %v754
      %v790 = vunpack.i.l.s16 %v757
      %v791 = vunpack.i.h.s16 %v757
      %v792 = vunpack.i.l.s16 %v761
      %v793 = vunpack.i.h.s16 %v761
      %v794 = vunpack.i.l.s16 %v764
      %v795 = vunpack.i.l.s16 %v767
      %v796 = vunpack.i.h.s16 %v767
      %v797 = vunpack.i.l.s16 %v771
      %v798 = vunpack.i.h.s16 %v771
      %v799 = vunpack.i.l.s16 %v774
      %s800 = scalar_lea.vmem %s1, 12
      %v801 = vld [vmem:[%s800] sm:$0xf]
      %v802 = vpack.i.b16 %v776, %v775
      %v803 = vpack.i.b16 %v778, %v777
      %v804 = vpack.i.b16 %v780, %v779
      %v805 = vpack.i.b16 %v782, %v781
      %v806 = vpack.i.b16 %v784, %v783
      %v807 = vpack.i.b16 %v786, %v785
      %v808 = vpack.i.b16 %v788, %v787
      %v809 = vpack.i.b16 %v790, %v789
      %v810 = vpack.i.b16 %v792, %v791
      %v811 = vpack.i.b16 %v794, %v793
      %v812 = vpack.i.b16 %v796, %v795
      %v813 = vpack.i.b16 %v798, %v797
      %816 = vst [vmem:[#allocation1] ss:$9 sm:$0xff] %v802
      %s818 = scalar_lea.vmem [#allocation1], 1
      %819 = vst [vmem:[%s818] ss:$9 sm:$0xff] %v803
      %s821 = scalar_lea.vmem [#allocation1], 2
      %822 = vst [vmem:[%s821] ss:$9 sm:$0xff] %v804
      %s824 = scalar_lea.vmem [#allocation1], 3
      %825 = vst [vmem:[%s824] ss:$9 sm:$0xff] %v805
      %s827 = scalar_lea.vmem [#allocation1], 4
      %828 = vst [vmem:[%s827] ss:$9 sm:$0xff] %v806
      %s830 = scalar_lea.vmem [#allocation1], 5
      %831 = vst [vmem:[%s830] ss:$9 sm:$0xff] %v807
      %s833 = scalar_lea.vmem [#allocation1], 6
      %834 = vst [vmem:[%s833] ss:$9 sm:$0xff] %v808
      %s836 = scalar_lea.vmem [#allocation1], 7
      %837 = vst [vmem:[%s836] ss:$9 sm:$0xff] %v809
      %v838 = vld [vmem:[#allocation1] sm:$0xff]
      %840 = vst [vmem:[#allocation1] ss:$9 sm:$0xff] %v810
      %842 = vst [vmem:[%s818] ss:$9 sm:$0xff] %v811
      %844 = vst [vmem:[%s821] ss:$9 sm:$0xff] %v812
      %846 = vst [vmem:[%s824] ss:$9 sm:$0xff] %v813
      %848 = vst [vmem:[%s827] ss:$9 sm:$0xff] %v799
      %v849 = vld [vmem:[#allocation1] sm:$0xff]
      %v850 = vsel %vm435, %v838, 0
      %v852 = vsel %vm435, %v849, 0
      %v855 = vsel %vm440, %v801, 0
      %857 = vmatpush.bf16.msra.mxu0 0
      %858 = vmatpush.bf16.msra.mxu0 0
      %859 = vmatpush.bf16.msra.mxu0 0
      %860 = vmatpush.bf16.msra.mxu0 0
      %861 = vmatpush.bf16.msra.mxu0 0
      %862 = vmatpush.bf16.msra.mxu0 0
      %863 = vmatpush.bf16.msra.mxu0 0
      %864 = vmatpush.bf16.msra.mxu0 %v855
      %865 = vmatmul.bf16.gmra.mxu0 %v850
      %v866 = vpop.f32.mrf.mxu0
      %v867 = vadd.f32 0.0, %v866
      %v868 = vpop.f32.mrf.mxu0
      %v869 = vadd.f32 0.0, %v868
      %870 = vmatmul.bf16.gmra.mxu0 %v852
      %v871 = vpop.f32.mrf.mxu0
      %v872 = vadd.f32 0.0, %v871
      %v873 = vpop.f32.mrf.mxu0
      %v874 = vadd.f32 0.0, %v873
      %875 = vdwg.mxu0
      %v876 = vadd.f32 %v703, %v867
      %v877 = vadd.f32 %v704, %v869
      %v878 = vadd.f32 %v705, %v872
      %v879 = vadd.f32 %v706, %v874
      %s880 = sadd.s32 %s195, 18
      %s881 = smul.addr %s880, 4
      %s882 = scalar_lea.vmem %s183, %s881
      %v883 = vld [vmem:[%s882] sm:$0x7]
      %v884 = vld [vmem:[%s882 + $0x4] sm:$0x7]
      %v885 = vld [vmem:[%s882 + $0x8] sm:$0x7]
      %v886 = vld [vmem:[%s882 + $0xc] sm:$0x7]
      %v887 = vld [vmem:[%s882 + $0x10] sm:$0x7]
      %v893 = vrot.slane %v883, 3
      %v894 = vrot.slane %v884, 3
      %v895 = vrot.slane %v885, 3
      %v896 = vrot.slane %v886, 3
      %v897 = vrot.slane %v887, 3
      %v900 = vsel %vm213, %v883, %v893
      %v902 = vsel %vm218, %v883, %v893
      %v904 = vrot.slane %v902, 1
      %v905 = vsel %vm222, %v883, %v893
      %v907 = vrot.slane %v905, 2
      %v910 = vsel %vm213, %v884, %v894
      %v912 = vsel %vm218, %v884, %v894
      %v914 = vrot.slane %v912, 1
      %v915 = vsel %vm222, %v884, %v894
      %v917 = vrot.slane %v915, 2
      %v920 = vsel %vm213, %v885, %v895
      %v922 = vsel %vm218, %v885, %v895
      %v924 = vrot.slane %v922, 1
      %v925 = vsel %vm222, %v885, %v895
      %v927 = vrot.slane %v925, 2
      %v930 = vsel %vm213, %v886, %v896
      %v932 = vsel %vm218, %v886, %v896
      %v934 = vrot.slane %v932, 1
      %v935 = vsel %vm222, %v886, %v896
      %v937 = vrot.slane %v935, 2
      %v940 = vsel %vm213, %v887, %v897
      %v942 = vsel %vm218, %v887, %v897
      %v944 = vrot.slane %v942, 1
      %v945 = vsel %vm222, %v887, %v897
      %v947 = vrot.slane %v945, 2
      %v948 = vunpack.i.l.s16 %v900
      %v949 = vunpack.i.h.s16 %v900
      %v950 = vunpack.i.l.s16 %v904
      %v951 = vunpack.i.h.s16 %v904
      %v952 = vunpack.i.l.s16 %v907
      %v953 = vunpack.i.l.s16 %v910
      %v954 = vunpack.i.h.s16 %v910
      %v955 = vunpack.i.l.s16 %v914
      %v956 = vunpack.i.h.s16 %v914
      %v957 = vunpack.i.l.s16 %v917
      %v958 = vunpack.i.l.s16 %v920
      %v959 = vunpack.i.h.s16 %v920
      %v960 = vunpack.i.l.s16 %v924
      %v961 = vunpack.i.h.s16 %v924
      %v962 = vunpack.i.l.s16 %v927
      %v963 = vunpack.i.l.s16 %v930
      %v964 = vunpack.i.h.s16 %v930
      %v965 = vunpack.i.l.s16 %v934
      %v966 = vunpack.i.h.s16 %v934
      %v967 = vunpack.i.l.s16 %v937
      %v968 = vunpack.i.l.s16 %v940
      %v969 = vunpack.i.h.s16 %v940
      %v970 = vunpack.i.l.s16 %v944
      %v971 = vunpack.i.h.s16 %v944
      %v972 = vunpack.i.l.s16 %v947
      %s973 = scalar_lea.vmem %s1, 16
      %v974 = vld [vmem:[%s973] sm:$0xf]
      %v975 = vpack.i.b16 %v949, %v948
      %v976 = vpack.i.b16 %v951, %v950
      %v977 = vpack.i.b16 %v953, %v952
      %v978 = vpack.i.b16 %v955, %v954
      %v979 = vpack.i.b16 %v957, %v956
      %v980 = vpack.i.b16 %v959, %v958
      %v981 = vpack.i.b16 %v961, %v960
      %v982 = vpack.i.b16 %v963, %v962
      %v983 = vpack.i.b16 %v965, %v964
      %v984 = vpack.i.b16 %v967, %v966
      %v985 = vpack.i.b16 %v969, %v968
      %v986 = vpack.i.b16 %v971, %v970
      %989 = vst [vmem:[#allocation1] ss:$9 sm:$0xff] %v975
      %s991 = scalar_lea.vmem [#allocation1], 1
      %992 = vst [vmem:[%s991] ss:$9 sm:$0xff] %v976
      %s994 = scalar_lea.vmem [#allocation1], 2
      %995 = vst [vmem:[%s994] ss:$9 sm:$0xff] %v977
      %s997 = scalar_lea.vmem [#allocation1], 3
      %998 = vst [vmem:[%s997] ss:$9 sm:$0xff] %v978
      %s1000 = scalar_lea.vmem [#allocation1], 4
      %1001 = vst [vmem:[%s1000] ss:$9 sm:$0xff] %v979
      %s1003 = scalar_lea.vmem [#allocation1], 5
      %1004 = vst [vmem:[%s1003] ss:$9 sm:$0xff] %v980
      %s1006 = scalar_lea.vmem [#allocation1], 6
      %1007 = vst [vmem:[%s1006] ss:$9 sm:$0xff] %v981
      %s1009 = scalar_lea.vmem [#allocation1], 7
      %1010 = vst [vmem:[%s1009] ss:$9 sm:$0xff] %v982
      %v1011 = vld [vmem:[#allocation1] sm:$0xff]
      %1013 = vst [vmem:[#allocation1] ss:$9 sm:$0xff] %v983
      %1015 = vst [vmem:[%s991] ss:$9 sm:$0xff] %v984
      %1017 = vst [vmem:[%s994] ss:$9 sm:$0xff] %v985
      %1019 = vst [vmem:[%s997] ss:$9 sm:$0xff] %v986
      %1021 = vst [vmem:[%s1000] ss:$9 sm:$0xff] %v972
      %v1022 = vld [vmem:[#allocation1] sm:$0xff]
      %v1023 = vsel %vm435, %v1011, 0
      %v1025 = vsel %vm435, %v1022, 0
      %v1028 = vsel %vm440, %v974, 0
      %1030 = vmatpush.bf16.msra.mxu0 0
      %1031 = vmatpush.bf16.msra.mxu0 0
      %1032 = vmatpush.bf16.msra.mxu0 0
      %1033 = vmatpush.bf16.msra.mxu0 0
      %1034 = vmatpush.bf16.msra.mxu0 0
      %1035 = vmatpush.bf16.msra.mxu0 0
      %1036 = vmatpush.bf16.msra.mxu0 0
      %1037 = vmatpush.bf16.msra.mxu0 %v1028
      %1038 = vmatmul.bf16.gmra.mxu0 %v1023
      %v1039 = vpop.f32.mrf.mxu0
      %v1040 = vadd.f32 0.0, %v1039
      %v1041 = vpop.f32.mrf.mxu0
      %v1042 = vadd.f32 0.0, %v1041
      %1043 = vmatmul.bf16.gmra.mxu0 %v1025
      %v1044 = vpop.f32.mrf.mxu0
      %v1045 = vadd.f32 0.0, %v1044
      %v1046 = vpop.f32.mrf.mxu0
      %v1047 = vadd.f32 0.0, %v1046
      %1048 = vdwg.mxu0
      %v1049 = vadd.f32 %v876, %v1040
      %v1050 = vadd.f32 %v877, %v1042
      %v1051 = vadd.f32 %v878, %v1045
      %v1052 = vadd.f32 %v879, %v1047
      %v1053 = vld [vmem:[%s709] sm:$0x7]
      %v1054 = vld [vmem:[%s709 + $0x4] sm:$0x7]
      %v1055 = vld [vmem:[%s709 + $0x8] sm:$0x7]
      %v1056 = vld [vmem:[%s709 + $0xc] sm:$0x7]
      %v1057 = vld [vmem:[%s709 + $0x10] sm:$0x7]
      %v1063 = vrot.slane %v1053, 3
      %v1064 = vrot.slane %v1054, 3
      %v1065 = vrot.slane %v1055, 3
      %v1066 = vrot.slane %v1056, 3
      %v1067 = vrot.slane %v1057, 3
      %v1070 = vsel %vm213, %v1053, %v1063
      %v1072 = vsel %vm218, %v1053, %v1063
      %v1074 = vrot.slane %v1072, 1
      %v1075 = vsel %vm222, %v1053, %v1063
      %v1077 = vrot.slane %v1075, 2
      %v1080 = vsel %vm213, %v1054, %v1064
      %v1082 = vsel %vm218, %v1054, %v1064
      %v1084 = vrot.slane %v1082, 1
      %v1085 = vsel %vm222, %v1054, %v1064
      %v1087 = vrot.slane %v1085, 2
      %v1090 = vsel %vm213, %v1055, %v1065
      %v1092 = vsel %vm218, %v1055, %v1065
      %v1094 = vrot.slane %v1092, 1
      %v1095 = vsel %vm222, %v1055, %v1065
      %v1097 = vrot.slane %v1095, 2
      %v1100 = vsel %vm213, %v1056, %v1066
      %v1102 = vsel %vm218, %v1056, %v1066
      %v1104 = vrot.slane %v1102, 1
      %v1105 = vsel %vm222, %v1056, %v1066
      %v1107 = vrot.slane %v1105, 2
      %v1110 = vsel %vm213, %v1057, %v1067
      %v1112 = vsel %vm218, %v1057, %v1067
      %v1114 = vrot.slane %v1112, 1
      %v1115 = vsel %vm222, %v1057, %v1067
      %v1117 = vrot.slane %v1115, 2
      %v1118 = vunpack.i.h.s16 %v1070
      %v1119 = vunpack.i.l.s16 %v1074
      %v1120 = vunpack.i.h.s16 %v1074
      %v1121 = vunpack.i.l.s16 %v1077
      %v1122 = vunpack.i.h.s16 %v1077
      %v1123 = vunpack.i.h.s16 %v1080
      %v1124 = vunpack.i.l.s16 %v1084
      %v1125 = vunpack.i.h.s16 %v1084
      %v1126 = vunpack.i.l.s16 %v1087
      %v1127 = vunpack.i.h.s16 %v1087
      %v1128 = vunpack.i.h.s16 %v1090
      %v1129 = vunpack.i.l.s16 %v1094
      %v1130 = vunpack.i.h.s16 %v1094
      %v1131 = vunpack.i.l.s16 %v1097
      %v1132 = vunpack.i.h.s16 %v1097
      %v1133 = vunpack.i.h.s16 %v1100
      %v1134 = vunpack.i.l.s16 %v1104
      %v1135 = vunpack.i.h.s16 %v1104
      %v1136 = vunpack.i.l.s16 %v1107
      %v1137 = vunpack.i.h.s16 %v1107
      %v1138 = vunpack.i.h.s16 %v1110
      %v1139 = vunpack.i.l.s16 %v1114
      %v1140 = vunpack.i.h.s16 %v1114
      %v1141 = vunpack.i.l.s16 %v1117
      %v1142 = vunpack.i.h.s16 %v1117
      %s1143 = scalar_lea.vmem %s1, 20
      %v1144 = vld [vmem:[%s1143] sm:$0xf]
      %v1145 = vpack.i.b16 %v1119, %v1118
      %v1146 = vpack.i.b16 %v1121, %v1120
      %v1147 = vpack.i.b16 %v1123, %v1122
      %v1148 = vpack.i.b16 %v1125, %v1124
      %v1149 = vpack.i.b16 %v1127, %v1126
      %v1150 = vpack.i.b16 %v1129, %v1128
      %v1151 = vpack.i.b16 %v1131, %v1130
      %v1152 = vpack.i.b16 %v1133, %v1132
      %v1153 = vpack.i.b16 %v1135, %v1134
      %v1154 = vpack.i.b16 %v1137, %v1136
      %v1155 = vpack.i.b16 %v1139, %v1138
      %v1156 = vpack.i.b16 %v1141, %v1140
      %1159 = vst [vmem:[#allocation1] ss:$9 sm:$0xff] %v1145
      %s1161 = scalar_lea.vmem [#allocation1], 1
      %1162 = vst [vmem:[%s1161] ss:$9 sm:$0xff] %v1146
      %s1164 = scalar_lea.vmem [#allocation1], 2
      %1165 = vst [vmem:[%s1164] ss:$9 sm:$0xff] %v1147
      %s1167 = scalar_lea.vmem [#allocation1], 3
      %1168 = vst [vmem:[%s1167] ss:$9 sm:$0xff] %v1148
      %s1170 = scalar_lea.vmem [#allocation1], 4
      %1171 = vst [vmem:[%s1170] ss:$9 sm:$0xff] %v1149
      %s1173 = scalar_lea.vmem [#allocation1], 5
      %1174 = vst [vmem:[%s1173] ss:$9 sm:$0xff] %v1150
      %s1176 = scalar_lea.vmem [#allocation1], 6
      %1177 = vst [vmem:[%s1176] ss:$9 sm:$0xff] %v1151
      %s1179 = scalar_lea.vmem [#allocation1], 7
      %1180 = vst [vmem:[%s1179] ss:$9 sm:$0xff] %v1152
      %v1181 = vld [vmem:[#allocation1] sm:$0xff]
      %1183 = vst [vmem:[#allocation1] ss:$9 sm:$0xff] %v1153
      %1185 = vst [vmem:[%s1161] ss:$9 sm:$0xff] %v1154
      %1187 = vst [vmem:[%s1164] ss:$9 sm:$0xff] %v1155
      %1189 = vst [vmem:[%s1167] ss:$9 sm:$0xff] %v1156
      %1191 = vst [vmem:[%s1170] ss:$9 sm:$0xff] %v1142
      %v1192 = vld [vmem:[#allocation1] sm:$0xff]
      %v1193 = vsel %vm435, %v1181, 0
      %v1195 = vsel %vm435, %v1192, 0
      %v1198 = vsel %vm440, %v1144, 0
      %1200 = vmatpush.bf16.msra.mxu0 0
      %1201 = vmatpush.bf16.msra.mxu0 0
      %1202 = vmatpush.bf16.msra.mxu0 0
      %1203 = vmatpush.bf16.msra.mxu0 0
      %1204 = vmatpush.bf16.msra.mxu0 0
      %1205 = vmatpush.bf16.msra.mxu0 0
      %1206 = vmatpush.bf16.msra.mxu0 0
      %1207 = vmatpush.bf16.msra.mxu0 %v1198
      %1208 = vmatmul.bf16.gmra.mxu0 %v1193
      %v1209 = vpop.f32.mrf.mxu0
      %v1210 = vadd.f32 0.0, %v1209
      %v1211 = vpop.f32.mrf.mxu0
      %v1212 = vadd.f32 0.0, %v1211
      %1213 = vmatmul.bf16.gmra.mxu0 %v1195
      %v1214 = vpop.f32.mrf.mxu0
      %v1215 = vadd.f32 0.0, %v1214
      %v1216 = vpop.f32.mrf.mxu0
      %v1217 = vadd.f32 0.0, %v1216
      %1218 = vdwg.mxu0
      %v1219 = vadd.f32 %v1049, %v1210
      %v1220 = vadd.f32 %v1050, %v1212
      %v1221 = vadd.f32 %v1051, %v1215
      %v1222 = vadd.f32 %v1052, %v1217
      %s1223 = sadd.s32 %s195, 1
      %s1224 = smul.addr %s1223, 4
      %s1225 = scalar_lea.vmem %s183, %s1224
      %v1226 = vld [vmem:[%s1225] sm:$0x7]
      %v1227 = vld [vmem:[%s1225 + $0x4] sm:$0x7]
      %v1228 = vld [vmem:[%s1225 + $0x8] sm:$0x7]
      %v1229 = vld [vmem:[%s1225 + $0xc] sm:$0x7]
      %v1230 = vld [vmem:[%s1225 + $0x10] sm:$0x7]
      %v1236 = vrot.slane %v1226, 3
      %v1237 = vrot.slane %v1227, 3
      %v1238 = vrot.slane %v1228, 3
      %v1239 = vrot.slane %v1229, 3
      %v1240 = vrot.slane %v1230, 3
      %v1243 = vsel %vm213, %v1226, %v1236
      %v1245 = vsel %vm218, %v1226, %v1236
      %v1247 = vrot.slane %v1245, 1
      %v1248 = vsel %vm222, %v1226, %v1236
      %v1250 = vrot.slane %v1248, 2
      %v1253 = vsel %vm213, %v1227, %v1237
      %v1255 = vsel %vm218, %v1227, %v1237
      %v1257 = vrot.slane %v1255, 1
      %v1258 = vsel %vm222, %v1227, %v1237
      %v1260 = vrot.slane %v1258, 2
      %v1263 = vsel %vm213, %v1228, %v1238
      %v1265 = vsel %vm218, %v1228, %v1238
      %v1267 = vrot.slane %v1265, 1
      %v1268 = vsel %vm222, %v1228, %v1238
      %v1270 = vrot.slane %v1268, 2
      %v1273 = vsel %vm213, %v1229, %v1239
      %v1275 = vsel %vm218, %v1229, %v1239
      %v1277 = vrot.slane %v1275, 1
      %v1278 = vsel %vm222, %v1229, %v1239
      %v1280 = vrot.slane %v1278, 2
      %v1283 = vsel %vm213, %v1230, %v1240
      %v1285 = vsel %vm218, %v1230, %v1240
      %v1287 = vrot.slane %v1285, 1
      %v1288 = vsel %vm222, %v1230, %v1240
      %v1290 = vrot.slane %v1288, 2
      %v1291 = vunpack.i.l.s16 %v1243
      %v1292 = vunpack.i.h.s16 %v1243
      %v1293 = vunpack.i.l.s16 %v1247
      %v1294 = vunpack.i.h.s16 %v1247
      %v1295 = vunpack.i.l.s16 %v1250
      %v1296 = vunpack.i.l.s16 %v1253
      %v1297 = vunpack.i.h.s16 %v1253
      %v1298 = vunpack.i.l.s16 %v1257
      %v1299 = vunpack.i.h.s16 %v1257
      %v1300 = vunpack.i.l.s16 %v1260
      %v1301 = vunpack.i.l.s16 %v1263
      %v1302 = vunpack.i.h.s16 %v1263
      %v1303 = vunpack.i.l.s16 %v1267
      %v1304 = vunpack.i.h.s16 %v1267
      %v1305 = vunpack.i.l.s16 %v1270
      %v1306 = vunpack.i.l.s16 %v1273
      %v1307 = vunpack.i.h.s16 %v1273
      %v1308 = vunpack.i.l.s16 %v1277
      %v1309 = vunpack.i.h.s16 %v1277
      %v1310 = vunpack.i.l.s16 %v1280
      %v1311 = vunpack.i.l.s16 %v1283
      %v1312 = vunpack.i.h.s16 %v1283
      %v1313 = vunpack.i.l.s16 %v1287
      %v1314 = vunpack.i.h.s16 %v1287
      %v1315 = vunpack.i.l.s16 %v1290
      %s1316 = scalar_lea.vmem %s1, 24
      %v1317 = vld [vmem:[%s1316] sm:$0xf]
      %v1318 = vpack.i.b16 %v1292, %v1291
      %v1319 = vpack.i.b16 %v1294, %v1293
      %v1320 = vpack.i.b16 %v1296, %v1295
      %v1321 = vpack.i.b16 %v1298, %v1297
      %v1322 = vpack.i.b16 %v1300, %v1299
      %v1323 = vpack.i.b16 %v1302, %v1301
      %v1324 = vpack.i.b16 %v1304, %v1303
      %v1325 = vpack.i.b16 %v1306, %v1305
      %v1326 = vpack.i.b16 %v1308, %v1307
      %v1327 = vpack.i.b16 %v1310, %v1309
      %v1328 = vpack.i.b16 %v1312, %v1311
      %v1329 = vpack.i.b16 %v1314, %v1313
      %1332 = vst [vmem:[#allocation1] ss:$9 sm:$0xff] %v1318
      %s1334 = scalar_lea.vmem [#allocation1], 1
      %1335 = vst [vmem:[%s1334] ss:$9 sm:$0xff] %v1319
      %s1337 = scalar_lea.vmem [#allocation1], 2
      %1338 = vst [vmem:[%s1337] ss:$9 sm:$0xff] %v1320
      %s1340 = scalar_lea.vmem [#allocation1], 3
      %1341 = vst [vmem:[%s1340] ss:$9 sm:$0xff] %v1321
      %s1343 = scalar_lea.vmem [#allocation1], 4
      %1344 = vst [vmem:[%s1343] ss:$9 sm:$0xff] %v1322
      %s1346 = scalar_lea.vmem [#allocation1], 5
      %1347 = vst [vmem:[%s1346] ss:$9 sm:$0xff] %v1323
      %s1349 = scalar_lea.vmem [#allocation1], 6
      %1350 = vst [vmem:[%s1349] ss:$9 sm:$0xff] %v1324
      %s1352 = scalar_lea.vmem [#allocation1], 7
      %1353 = vst [vmem:[%s1352] ss:$9 sm:$0xff] %v1325
      %v1354 = vld [vmem:[#allocation1] sm:$0xff]
      %1356 = vst [vmem:[#allocation1] ss:$9 sm:$0xff] %v1326
      %1358 = vst [vmem:[%s1334] ss:$9 sm:$0xff] %v1327
      %1360 = vst [vmem:[%s1337] ss:$9 sm:$0xff] %v1328
      %1362 = vst [vmem:[%s1340] ss:$9 sm:$0xff] %v1329
      %1364 = vst [vmem:[%s1343] ss:$9 sm:$0xff] %v1315
      %v1365 = vld [vmem:[#allocation1] sm:$0xff]
      %v1366 = vsel %vm435, %v1354, 0
      %v1368 = vsel %vm435, %v1365, 0
      %v1371 = vsel %vm440, %v1317, 0
      %1373 = vmatpush.bf16.msra.mxu0 0
      %1374 = vmatpush.bf16.msra.mxu0 0
      %1375 = vmatpush.bf16.msra.mxu0 0
      %1376 = vmatpush.bf16.msra.mxu0 0
      %1377 = vmatpush.bf16.msra.mxu0 0
      %1378 = vmatpush.bf16.msra.mxu0 0
      %1379 = vmatpush.bf16.msra.mxu0 0
      %1380 = vmatpush.bf16.msra.mxu0 %v1371
      %1381 = vmatmul.bf16.gmra.mxu0 %v1366
      %v1382 = vpop.f32.mrf.mxu0
      %v1383 = vadd.f32 0.0, %v1382
      %v1384 = vpop.f32.mrf.mxu0
      %v1385 = vadd.f32 0.0, %v1384
      %1386 = vmatmul.bf16.gmra.mxu0 %v1368
      %v1387 = vpop.f32.mrf.mxu0
      %v1388 = vadd.f32 0.0, %v1387
      %v1389 = vpop.f32.mrf.mxu0
      %v1390 = vadd.f32 0.0, %v1389
      %1391 = vdwg.mxu0
      %v1392 = vadd.f32 %v1219, %v1383
      %v1393 = vadd.f32 %v1220, %v1385
      %v1394 = vadd.f32 %v1221, %v1388
      %v1395 = vadd.f32 %v1222, %v1390
      %s1396 = sadd.s32 %s1223, 6
      %s1397 = smul.addr %s1396, 4
      %s1398 = scalar_lea.vmem %s183, %s1397
      %v1399 = vld [vmem:[%s1398] sm:$0x7]
      %v1400 = vld [vmem:[%s1398 + $0x4] sm:$0x7]
      %v1401 = vld [vmem:[%s1398 + $0x8] sm:$0x7]
      %v1402 = vld [vmem:[%s1398 + $0xc] sm:$0x7]
      %v1403 = vld [vmem:[%s1398 + $0x10] sm:$0x7]
      %v1409 = vrot.slane %v1399, 3
      %v1410 = vrot.slane %v1400, 3
      %v1411 = vrot.slane %v1401, 3
      %v1412 = vrot.slane %v1402, 3
      %v1413 = vrot.slane %v1403, 3
      %v1416 = vsel %vm213, %v1399, %v1409
      %v1418 = vsel %vm218, %v1399, %v1409
      %v1420 = vrot.slane %v1418, 1
      %v1421 = vsel %vm222, %v1399, %v1409
      %v1423 = vrot.slane %v1421, 2
      %v1426 = vsel %vm213, %v1400, %v1410
      %v1428 = vsel %vm218, %v1400, %v1410
      %v1430 = vrot.slane %v1428, 1
      %v1431 = vsel %vm222, %v1400, %v1410
      %v1433 = vrot.slane %v1431, 2
      %v1436 = vsel %vm213, %v1401, %v1411
      %v1438 = vsel %vm218, %v1401, %v1411
      %v1440 = vrot.slane %v1438, 1
      %v1441 = vsel %vm222, %v1401, %v1411
      %v1443 = vrot.slane %v1441, 2
      %v1446 = vsel %vm213, %v1402, %v1412
      %v1448 = vsel %vm218, %v1402, %v1412
      %v1450 = vrot.slane %v1448, 1
      %v1451 = vsel %vm222, %v1402, %v1412
      %v1453 = vrot.slane %v1451, 2
      %v1456 = vsel %vm213, %v1403, %v1413
      %v1458 = vsel %vm218, %v1403, %v1413
      %v1460 = vrot.slane %v1458, 1
      %v1461 = vsel %vm222, %v1403, %v1413
      %v1463 = vrot.slane %v1461, 2
      %v1464 = vunpack.i.l.s16 %v1416
      %v1465 = vunpack.i.h.s16 %v1416
      %v1466 = vunpack.i.l.s16 %v1420
      %v1467 = vunpack.i.h.s16 %v1420
      %v1468 = vunpack.i.l.s16 %v1423
      %v1469 = vunpack.i.l.s16 %v1426
      %v1470 = vunpack.i.h.s16 %v1426
      %v1471 = vunpack.i.l.s16 %v1430
      %v1472 = vunpack.i.h.s16 %v1430
      %v1473 = vunpack.i.l.s16 %v1433
      %v1474 = vunpack.i.l.s16 %v1436
      %v1475 = vunpack.i.h.s16 %v1436
      %v1476 = vunpack.i.l.s16 %v1440
      %v1477 = vunpack.i.h.s16 %v1440
      %v1478 = vunpack.i.l.s16 %v1443
      %v1479 = vunpack.i.l.s16 %v1446
      %v1480 = vunpack.i.h.s16 %v1446
      %v1481 = vunpack.i.l.s16 %v1450
      %v1482 = vunpack.i.h.s16 %v1450
      %v1483 = vunpack.i.l.s16 %v1453
      %v1484 = vunpack.i.l.s16 %v1456
      %v1485 = vunpack.i.h.s16 %v1456
      %v1486 = vunpack.i.l.s16 %v1460
      %v1487 = vunpack.i.h.s16 %v1460
      %v1488 = vunpack.i.l.s16 %v1463
      %s1489 = scalar_lea.vmem %s1, 28
      %v1490 = vld [vmem:[%s1489] sm:$0xf]
      %v1491 = vpack.i.b16 %v1465, %v1464
      %v1492 = vpack.i.b16 %v1467, %v1466
      %v1493 = vpack.i.b16 %v1469, %v1468
      %v1494 = vpack.i.b16 %v1471, %v1470
      %v1495 = vpack.i.b16 %v1473, %v1472
      %v1496 = vpack.i.b16 %v1475, %v1474
      %v1497 = vpack.i.b16 %v1477, %v1476
      %v1498 = vpack.i.b16 %v1479, %v1478
      %v1499 = vpack.i.b16 %v1481, %v1480
      %v1500 = vpack.i.b16 %v1483, %v1482
      %v1501 = vpack.i.b16 %v1485, %v1484
      %v1502 = vpack.i.b16 %v1487, %v1486
      %1505 = vst [vmem:[#allocation1] ss:$9 sm:$0xff] %v1491
      %s1507 = scalar_lea.vmem [#allocation1], 1
      %1508 = vst [vmem:[%s1507] ss:$9 sm:$0xff] %v1492
      %s1510 = scalar_lea.vmem [#allocation1], 2
      %1511 = vst [vmem:[%s1510] ss:$9 sm:$0xff] %v1493
      %s1513 = scalar_lea.vmem [#allocation1], 3
      %1514 = vst [vmem:[%s1513] ss:$9 sm:$0xff] %v1494
      %s1516 = scalar_lea.vmem [#allocation1], 4
      %1517 = vst [vmem:[%s1516] ss:$9 sm:$0xff] %v1495
      %s1519 = scalar_lea.vmem [#allocation1], 5
      %1520 = vst [vmem:[%s1519] ss:$9 sm:$0xff] %v1496
      %s1522 = scalar_lea.vmem [#allocation1], 6
      %1523 = vst [vmem:[%s1522] ss:$9 sm:$0xff] %v1497
      %s1525 = scalar_lea.vmem [#allocation1], 7
      %1526 = vst [vmem:[%s1525] ss:$9 sm:$0xff] %v1498
      %v1527 = vld [vmem:[#allocation1] sm:$0xff]
      %1529 = vst [vmem:[#allocation1] ss:$9 sm:$0xff] %v1499
      %1531 = vst [vmem:[%s1507] ss:$9 sm:$0xff] %v1500
      %1533 = vst [vmem:[%s1510] ss:$9 sm:$0xff] %v1501
      %1535 = vst [vmem:[%s1513] ss:$9 sm:$0xff] %v1502
      %1537 = vst [vmem:[%s1516] ss:$9 sm:$0xff] %v1488
      %v1538 = vld [vmem:[#allocation1] sm:$0xff]
      %v1539 = vsel %vm435, %v1527, 0
      %v1541 = vsel %vm435, %v1538, 0
      %v1544 = vsel %vm440, %v1490, 0
      %1546 = vmatpush.bf16.msra.mxu0 0
      %1547 = vmatpush.bf16.msra.mxu0 0
      %1548 = vmatpush.bf16.msra.mxu0 0
      %1549 = vmatpush.bf16.msra.mxu0 0
      %1550 = vmatpush.bf16.msra.mxu0 0
      %1551 = vmatpush.bf16.msra.mxu0 0
      %1552 = vmatpush.bf16.msra.mxu0 0
      %1553 = vmatpush.bf16.msra.mxu0 %v1544
      %1554 = vmatmul.bf16.gmra.mxu0 %v1539
      %v1555 = vpop.f32.mrf.mxu0
      %v1556 = vadd.f32 0.0, %v1555
      %v1557 = vpop.f32.mrf.mxu0
      %v1558 = vadd.f32 0.0, %v1557
      %1559 = vmatmul.bf16.gmra.mxu0 %v1541
      %v1560 = vpop.f32.mrf.mxu0
      %v1561 = vadd.f32 0.0, %v1560
      %v1562 = vpop.f32.mrf.mxu0
      %v1563 = vadd.f32 0.0, %v1562
      %1564 = vdwg.mxu0
      %v1565 = vadd.f32 %v1392, %v1556
      %v1566 = vadd.f32 %v1393, %v1558
      %v1567 = vadd.f32 %v1394, %v1561
      %v1568 = vadd.f32 %v1395, %v1563
      %v1569 = vld [vmem:[%s1225] sm:$0x7]
      %v1570 = vld [vmem:[%s1225 + $0x4] sm:$0x7]
      %v1571 = vld [vmem:[%s1225 + $0x8] sm:$0x7]
      %v1572 = vld [vmem:[%s1225 + $0xc] sm:$0x7]
      %v1573 = vld [vmem:[%s1225 + $0x10] sm:$0x7]
      %v1579 = vrot.slane %v1569, 3
      %v1580 = vrot.slane %v1570, 3
      %v1581 = vrot.slane %v1571, 3
      %v1582 = vrot.slane %v1572, 3
      %v1583 = vrot.slane %v1573, 3
      %v1586 = vsel %vm213, %v1569, %v1579
      %v1588 = vsel %vm218, %v1569, %v1579
      %v1590 = vrot.slane %v1588, 1
      %v1591 = vsel %vm222, %v1569, %v1579
      %v1593 = vrot.slane %v1591, 2
      %v1596 = vsel %vm213, %v1570, %v1580
      %v1598 = vsel %vm218, %v1570, %v1580
      %v1600 = vrot.slane %v1598, 1
      %v1601 = vsel %vm222, %v1570, %v1580
      %v1603 = vrot.slane %v1601, 2
      %v1606 = vsel %vm213, %v1571, %v1581
      %v1608 = vsel %vm218, %v1571, %v1581
      %v1610 = vrot.slane %v1608, 1
      %v1611 = vsel %vm222, %v1571, %v1581
      %v1613 = vrot.slane %v1611, 2
      %v1616 = vsel %vm213, %v1572, %v1582
      %v1618 = vsel %vm218, %v1572, %v1582
      %v1620 = vrot.slane %v1618, 1
      %v1621 = vsel %vm222, %v1572, %v1582
      %v1623 = vrot.slane %v1621, 2
      %v1626 = vsel %vm213, %v1573, %v1583
      %v1628 = vsel %vm218, %v1573, %v1583
      %v1630 = vrot.slane %v1628, 1
      %v1631 = vsel %vm222, %v1573, %v1583
      %v1633 = vrot.slane %v1631, 2
      %v1634 = vunpack.i.h.s16 %v1586
      %v1635 = vunpack.i.l.s16 %v1590
      %v1636 = vunpack.i.h.s16 %v1590
      %v1637 = vunpack.i.l.s16 %v1593
      %v1638 = vunpack.i.h.s16 %v1593
      %v1639 = vunpack.i.h.s16 %v1596
      %v1640 = vunpack.i.l.s16 %v1600
      %v1641 = vunpack.i.h.s16 %v1600
      %v1642 = vunpack.i.l.s16 %v1603
      %v1643 = vunpack.i.h.s16 %v1603
      %v1644 = vunpack.i.h.s16 %v1606
      %v1645 = vunpack.i.l.s16 %v1610
      %v1646 = vunpack.i.h.s16 %v1610
      %v1647 = vunpack.i.l.s16 %v1613
      %v1648 = vunpack.i.h.s16 %v1613
      %v1649 = vunpack.i.h.s16 %v1616
      %v1650 = vunpack.i.l.s16 %v1620
      %v1651 = vunpack.i.h.s16 %v1620
      %v1652 = vunpack.i.l.s16 %v1623
      %v1653 = vunpack.i.h.s16 %v1623
      %v1654 = vunpack.i.h.s16 %v1626
      %v1655 = vunpack.i.l.s16 %v1630
      %v1656 = vunpack.i.h.s16 %v1630
      %v1657 = vunpack.i.l.s16 %v1633
      %v1658 = vunpack.i.h.s16 %v1633
      %s1659 = scalar_lea.vmem %s1, 32
      %v1660 = vld [vmem:[%s1659] sm:$0xf]
      %v1661 = vpack.i.b16 %v1635, %v1634
      %v1662 = vpack.i.b16 %v1637, %v1636
      %v1663 = vpack.i.b16 %v1639, %v1638
      %v1664 = vpack.i.b16 %v1641, %v1640
      %v1665 = vpack.i.b16 %v1643, %v1642
      %v1666 = vpack.i.b16 %v1645, %v1644
      %v1667 = vpack.i.b16 %v1647, %v1646
      %v1668 = vpack.i.b16 %v1649, %v1648
      %v1669 = vpack.i.b16 %v1651, %v1650
      %v1670 = vpack.i.b16 %v1653, %v1652
      %v1671 = vpack.i.b16 %v1655, %v1654
      %v1672 = vpack.i.b16 %v1657, %v1656
      %1675 = vst [vmem:[#allocation1] ss:$9 sm:$0xff] %v1661
      %s1677 = scalar_lea.vmem [#allocation1], 1
      %1678 = vst [vmem:[%s1677] ss:$9 sm:$0xff] %v1662
      %s1680 = scalar_lea.vmem [#allocation1], 2
      %1681 = vst [vmem:[%s1680] ss:$9 sm:$0xff] %v1663
      %s1683 = scalar_lea.vmem [#allocation1], 3
      %1684 = vst [vmem:[%s1683] ss:$9 sm:$0xff] %v1664
      %s1686 = scalar_lea.vmem [#allocation1], 4
      %1687 = vst [vmem:[%s1686] ss:$9 sm:$0xff] %v1665
      %s1689 = scalar_lea.vmem [#allocation1], 5
      %1690 = vst [vmem:[%s1689] ss:$9 sm:$0xff] %v1666
      %s1692 = scalar_lea.vmem [#allocation1], 6
      %1693 = vst [vmem:[%s1692] ss:$9 sm:$0xff] %v1667
      %s1695 = scalar_lea.vmem [#allocation1], 7
      %1696 = vst [vmem:[%s1695] ss:$9 sm:$0xff] %v1668
      %v1697 = vld [vmem:[#allocation1] sm:$0xff]
      %1699 = vst [vmem:[#allocation1] ss:$9 sm:$0xff] %v1669
      %1701 = vst [vmem:[%s1677] ss:$9 sm:$0xff] %v1670
      %1703 = vst [vmem:[%s1680] ss:$9 sm:$0xff] %v1671
      %1705 = vst [vmem:[%s1683] ss:$9 sm:$0xff] %v1672
      %1707 = vst [vmem:[%s1686] ss:$9 sm:$0xff] %v1658
      %v1708 = vld [vmem:[#allocation1] sm:$0xff]
      %v1709 = vsel %vm435, %v1697, 0
      %v1711 = vsel %vm435, %v1708, 0
      %v1714 = vsel %vm440, %v1660, 0
      %1716 = vmatpush.bf16.msra.mxu0 0
      %1717 = vmatpush.bf16.msra.mxu0 0
      %1718 = vmatpush.bf16.msra.mxu0 0
      %1719 = vmatpush.bf16.msra.mxu0 0
      %1720 = vmatpush.bf16.msra.mxu0 0
      %1721 = vmatpush.bf16.msra.mxu0 0
      %1722 = vmatpush.bf16.msra.mxu0 0
      %1723 = vmatpush.bf16.msra.mxu0 %v1714
      %1724 = vmatmul.bf16.gmra.mxu0 %v1709
      %v1725 = vpop.f32.mrf.mxu0
      %v1726 = vadd.f32 0.0, %v1725
      %v1727 = vpop.f32.mrf.mxu0
      %v1728 = vadd.f32 0.0, %v1727
      %1729 = vmatmul.bf16.gmra.mxu0 %v1711
      %v1730 = vpop.f32.mrf.mxu0
      %v1731 = vadd.f32 0.0, %v1730
      %v1732 = vpop.f32.mrf.mxu0
      %v1733 = vadd.f32 0.0, %v1732
      %1734 = vdwg.mxu0
      %v1735 = vadd.f32 %v1565, %v1726
      %v1736 = vadd.f32 %v1566, %v1728
      %v1737 = vadd.f32 %v1567, %v1731
      %v1738 = vadd.f32 %v1568, %v1733
      %v1739 = vld [vmem:[%s2] sm:$0x1]
      %v1741 = vperm.slane %v1739, 0
      %v1743 = vadd.f32 %v1735, %v1741
      %v1744 = vadd.f32 %v1736, %v1741
      %v1745 = vadd.f32 %v1737, %v1741
      %v1746 = vadd.f32 %v1738, %v1741
      %v1751 = vrot.slane %v1743, 1
      %v1752 = vrot.slane %v1743, 2
      %v1753 = vrot.slane %v1743, 3
      %v1754 = vrot.slane %v1743, 4
      %v1755 = vrot.slane %v1743, 5
      %v1756 = vrot.slane %v1743, 6
      %v1757 = vrot.slane %v1743, 7
      %v1758 = vrot.slane %v1744, 1
      %v1759 = vrot.slane %v1744, 2
      %v1760 = vrot.slane %v1744, 3
      %v1761 = vrot.slane %v1744, 4
      %v1762 = vrot.slane %v1744, 5
      %v1763 = vrot.slane %v1744, 6
      %v1764 = vrot.slane %v1744, 7
      %v1765 = vrot.slane %v1745, 1
      %v1766 = vrot.slane %v1745, 2
      %v1767 = vrot.slane %v1745, 3
      %v1768 = vrot.slane %v1745, 4
      %v1769 = vrot.slane %v1745, 5
      %v1770 = vrot.slane %v1745, 6
      %v1771 = vrot.slane %v1745, 7
      %1772 = vst [vmem:[#allocation1] ss:$9 sm:$0xff] %v1743
      %s1773 = scalar_lea.vmem [#allocation1], 1
      %1774 = vst [vmem:[%s1773] ss:$9 sm:$0xff] %v1751
      %s1775 = scalar_lea.vmem [#allocation1], 2
      %1776 = vst [vmem:[%s1775] ss:$9 sm:$0xff] %v1752
      %s1777 = scalar_lea.vmem [#allocation1], 3
      %1778 = vst [vmem:[%s1777] ss:$9 sm:$0xff] %v1753
      %s1779 = scalar_lea.vmem [#allocation1], 4
      %1780 = vst [vmem:[%s1779] ss:$9 sm:$0xff] %v1754
      %v1781 = vld [vmem:[#allocation1] sm:$0xff]
      %1782 = vst [vmem:[#allocation1] ss:$9 sm:$0xff] %v1755
      %1783 = vst [vmem:[%s1773] ss:$9 sm:$0xff] %v1756
      %1784 = vst [vmem:[%s1775] ss:$9 sm:$0xff] %v1757
      %1785 = vst [vmem:[%s1777] ss:$9 sm:$0xff] %v1744
      %1786 = vst [vmem:[%s1779] ss:$9 sm:$0xff] %v1758
      %v1787 = vld [vmem:[#allocation1] sm:$0xff]
      %1788 = vst [vmem:[#allocation1] ss:$9 sm:$0xff] %v1759
      %1789 = vst [vmem:[%s1773] ss:$9 sm:$0xff] %v1760
      %1790 = vst [vmem:[%s1775] ss:$9 sm:$0xff] %v1761
      %1791 = vst [vmem:[%s1777] ss:$9 sm:$0xff] %v1762
      %1792 = vst [vmem:[%s1779] ss:$9 sm:$0xff] %v1763
      %v1793 = vld [vmem:[#allocation1] sm:$0xff]
      %1794 = vst [vmem:[#allocation1] ss:$9 sm:$0xff] %v1764
      %1795 = vst [vmem:[%s1773] ss:$9 sm:$0xff] %v1745
      %1796 = vst [vmem:[%s1775] ss:$9 sm:$0xff] %v1765
      %1797 = vst [vmem:[%s1777] ss:$9 sm:$0xff] %v1766
      %1798 = vst [vmem:[%s1779] ss:$9 sm:$0xff] %v1767
      %v1799 = vld [vmem:[#allocation1] sm:$0xff]
      %1800 = vst [vmem:[#allocation1] ss:$9 sm:$0xff] %v1768
      %1801 = vst [vmem:[%s1773] ss:$9 sm:$0xff] %v1769
      %1802 = vst [vmem:[%s1775] ss:$9 sm:$0xff] %v1770
      %1803 = vst [vmem:[%s1777] ss:$9 sm:$0xff] %v1771
      %1804 = vst [vmem:[%s1779] ss:$9 sm:$0xff] %v1746
      %v1805 = vld [vmem:[#allocation1] sm:$0xff]
      %v1811 = vpack.c.bf16 %v1781, %v1781
      %v1812 = vpack.c.bf16 %v1787, %v1787
      %v1813 = vpack.c.bf16 %v1793, %v1793
      %v1814 = vpack.c.bf16 %v1799, %v1799
      %v1815 = vpack.c.bf16 %v1805, %v1805
      %vm1816 = vcmask 51200
      %vm1817 = vsmask.f32 2304
      %vm1818 = vmand %vm1816, %vm1817
      %v1819 = vld [vmem:[%s192] sm:$0x7]
      %v1820 = vsel %vm1818, %v1811, %v1819
      %1821 = vst [vmem:[%s192] sm:$0x7] %v1820
      %v1822 = vld [vmem:[%s192 + $0x4] sm:$0x7]
      %v1823 = vsel %vm1818, %v1812, %v1822
      %1824 = vst [vmem:[%s192 + $0x4] sm:$0x7] %v1823
      %v1825 = vld [vmem:[%s192 + $0x8] sm:$0x7]
      %v1826 = vsel %vm1818, %v1813, %v1825
      %1827 = vst [vmem:[%s192 + $0x8] sm:$0x7] %v1826
      %v1828 = vld [vmem:[%s192 + $0xc] sm:$0x7]
      %v1829 = vsel %vm1818, %v1814, %v1828
      %1830 = vst [vmem:[%s192 + $0xc] sm:$0x7] %v1829
      %v1831 = vld [vmem:[%s192 + $0x10] sm:$0x7]
      %v1832 = vsel %vm1818, %v1815, %v1831
      %1833 = vst [vmem:[%s192 + $0x10] sm:$0x7] %v1832
      %s1834 = smul.u32 5, %s19
      %p1835 = scmp.lt.s32.totalorder %s18, 1
      %s1836 = scalar_select %p1835, %s18, 1
      %p1837 = scmp.lt.s32.totalorder %s1834, 4
      %s1838 = scalar_select %p1837, %s1834, 4
      %s1839 = smul.addr %s1836, 5
      %s1840 = sadd.s32 %s1838, %s1839
      %s1841 = smul.addr %s1840, 4
      %s1842 = scalar_lea.vmem %s3, %s1841
      // Predicated region
      $region33: #{tpu_custom_call.1} parent=31 // pred_check
        %p1843 = pneg %p114
      $region34: #{tpu_custom_call.1} parent=31 // pred_check_branch
        %1845 = sbr.rel (%p1843) target = $region36
      $region35: #{tpu_custom_call.1} parent=31 // pred_region
        %s1846 = smul.u32 5, %s19
      $region36: #{tpu_custom_call.1} parent=31 // pred_fallthru
        _
    $region32: #{tpu_custom_call.1} parent=5 // pred_fallthru
      _
    %p1847 = scmp.le.s32.totalorder 2, %s9
    // Predicated region
    $region37: #{tpu_custom_call.1} parent=5 // pred_check
      %p1848 = pneg %p1847
    $region38: #{tpu_custom_call.1} parent=5 // pred_check_branch
      %1850 = sbr.rel (%p1848) target = $region40
    $region39: #{tpu_custom_call.1} parent=5 // pred_region
      %s1851 = ssub.s32 %s9, 2
      // Predicated region
      $region41: #{tpu_custom_call.1} parent=39 // pred_check
        %p1852 = pneg %p120
      $region42: #{tpu_custom_call.1} parent=39 // pred_check_branch
        %1854 = sbr.rel (%p1852) target = $region44
      $region43: #{tpu_custom_call.1} parent=39 // pred_region
        %s1855 = smul.u32 5, %s21
        %p1856 = scmp.lt.s32.totalorder %s20, 1
        %s1857 = scalar_select %p1856, %s20, 1
        %p1858 = scmp.lt.s32.totalorder %s1855, 4
        %s1859 = scalar_select %p1858, %s1855, 4
        %s1860 = smul.addr %s1857, 5
        %s1861 = sadd.s32 %s1859, %s1860
        %s1862 = smul.addr %s1861, 4
        %s1863 = scalar_lea.vmem %s3, %s1862
      $region44: #{tpu_custom_call.1} parent=39 // pred_fallthru
        _
    $region40: #{tpu_custom_call.1} parent=5 // pred_fallthru
      _
  $region6: #{tpu_custom_call.1} parent=0 // loop_footer
    %s13 = sadd.s32 1, %s9
  $region7: #{tpu_custom_call.1} parent=0 // loop_footer_branch
    %8 = sbr.rel target = $region3
  $region8: #{tpu_custom_call.1} parent=0 // loop_exit
    _

</llo_original>
